<compile_context>
chip_gen: v5e
topology: v5e:2x2
jax: 0.10.0
libtpu: 0.0.40
codegen_flags: <defaults>
</compile_context>

<pallas_src>
import functools

import numpy as np
import jax
import jax.numpy as jnp
from jax import lax
from jax.experimental import pallas as pl
from jax.experimental.pallas import tpu as pltpu


def _round_up(x, m):
    return ((x + m - 1) // m) * m


# ----------------------------------------------------------------------------
# Pallas kernel: fused single-matmul gather + add + LayerNorm for a row block.
# ----------------------------------------------------------------------------
def bert_embeddings_kernel(wid_ref, aid_ref, pid_ref, tab_ref,
                           gamma_ref, beta_ref, out_ref):
    bn = wid_ref.shape[0]
    Vt = tab_ref.shape[0]

    # ids are pre-offset into the fused table (disjoint id ranges), so the
    # OR'd one-hot has exactly three 1s per row and ONE matmul yields the
    # summed embedding word+age+posi.
    cols = lax.broadcasted_iota(jnp.int32, (bn, Vt), 1)        # (bn, Vt)
    wid = wid_ref[...]                                         # (bn, 1)
    aid = aid_ref[...]
    pid = pid_ref[...]
    onehot = ((cols == wid) | (cols == aid) | (cols == pid)).astype(jnp.float32)
    emb = jnp.dot(onehot, tab_ref[...],
                  preferred_element_type=jnp.float32)          # (bn, H) f32

    # BertLayerNorm: u = mean; s = mean((x-u)^2); (x-u)/sqrt(s+eps)*w + b
    mean = jnp.mean(emb, axis=-1, keepdims=True)
    cent = emb - mean
    var = jnp.mean(cent * cent, axis=-1, keepdims=True)
    normed = cent * lax.rsqrt(var + 1e-12)
    out = normed * gamma_ref[...] + beta_ref[...]

    # TODO(synk): nn.Dropout is a no-op in eval mode; training-mode dropout
    # (with pltpu.prng_random_bits) is not emitted here.
    out_ref[...] = out.astype(out_ref.dtype)


# ----------------------------------------------------------------------------
# Wrapper
# ----------------------------------------------------------------------------
@functools.partial(jax.jit, static_argnames=("block_rows",))
def bert_embeddings(word_ids, age_ids, seg_ids, posi_ids,
                    word_tab, age_tab, posi_tab, gamma, beta,
                    *, block_rows=256):
    """word_ids/age_ids/posi_ids: (B, S) int32.  Returns (B, S, H) float32.

    `seg_ids` is accepted for API parity but (as in the PyTorch forward)
    segment embeddings are NOT added to the sum.

    Ids are assumed in-range for their respective vocabularies (same contract
    as nn.Embedding).

    TODO(synk): for production-size vocabularies (tens of thousands of rows)
    the resident-full-table one-hot design should be replaced by a
    scalar-prefetch DMA row gather (memory_space=pl.ANY table), especially on
    v7x (64 MiB VMEM).
    """
    del seg_ids  # unused in the reference forward
    B, S = word_ids.shape
    H = word_tab.shape[1]
    N = B * S
    N_pad = _round_up(max(N, 1), block_rows)
    n_blocks = N_pad // block_rows

    # --- fuse the three tables with 128-aligned vocab dims -------------------
    def pad_vocab(tab):
        V = tab.shape[0]
        Vp = _round_up(V, 128)
        return jnp.pad(tab.astype(jnp.float32), ((0, Vp - V), (0, 0))), Vp

    word_p, Vw = pad_vocab(word_tab)
    age_p, Va = pad_vocab(age_tab)
    posi_p, _ = pad_vocab(posi_tab)
    fused_tab = jnp.concatenate([word_p, age_p, posi_p], axis=0)   # (V_tot, H)
    age_off = Vw
    posi_off = Vw + Va

    # --- ids: flatten, pad the row tail (pad rows use a valid id, discarded) -
    def prep_ids(ids, offset):
        flat = ids.reshape(N).astype(jnp.int32)
        flat = jnp.pad(flat, (0, N_pad - N))       # pad rows -> id 0 (valid)
        return (flat + offset).reshape(N_pad, 1)

    wid = prep_ids(word_ids, 0)
    aid = prep_ids(age_ids, age_off)
    pid = prep_ids(posi_ids, posi_off)

    gamma2 = gamma.reshape(1, H).astype(jnp.float32)
    beta2 = beta.reshape(1, H).astype(jnp.float32)

    ids_spec = pl.BlockSpec((block_rows, 1), lambda i: (i, 0))
    full = lambda arr: pl.BlockSpec(arr.shape, lambda i: (0, 0))

    out = pl.pallas_call(
        bert_embeddings_kernel,
        out_shape=jax.ShapeDtypeStruct((N_pad, H), jnp.float32),
        grid_spec=pltpu.PrefetchScalarGridSpec(
            num_scalar_prefetch=0,
            grid=(n_blocks,),
            in_specs=[ids_spec, ids_spec, ids_spec,
                      full(fused_tab), full(gamma2), full(beta2)],
            out_specs=pl.BlockSpec((block_rows, H), lambda i: (i, 0)),
        ),
        compiler_params=pltpu.CompilerParams(
            dimension_semantics=("parallel",)),
    )(wid, aid, pid, fused_tab, gamma2, beta2)

    return out[:N].reshape(B, S, H)


# ----------------------------------------------------------------------------
# Deterministic parameter construction (mirrors module __init__)
# ----------------------------------------------------------------------------
def init_posi_embedding(max_position_embedding, hidden_size):
    pos = np.arange(max_position_embedding, dtype=np.float32)[:, None]   # (P,1)
    idx = np.arange(hidden_size, dtype=np.float32)[None, :]              # (1,H)
    angle = pos / (10000.0 ** (2.0 * idx / hidden_size))
    table = np.where((np.arange(hidden_size) % 2 == 0)[None, :],
                     np.sin(angle), np.cos(angle)).astype(np.float32)
    return jnp.asarray(table)


def jax_reference(word_ids, age_ids, posi_ids, word_tab, age_tab, posi_tab,
                  gamma, beta):
    emb = word_tab[word_ids] + age_tab[age_ids] + posi_tab[posi_ids]
    u = emb.mean(-1, keepdims=True)
    s = ((emb - u) ** 2).mean(-1, keepdims=True)
    x = (emb - u) / jnp.sqrt(s + 1e-12)
    return gamma * x + beta


if __name__ == "__main__":
    # config
    vocab_size = 128
    seg_vocab_size = 2        # defined in __init__ but unused in forward
    age_vocab_size = 112
    max_position_embeddings = 64
    hidden_size = 128
    batch, seq = 2, 8

    key = jax.random.PRNGKey(0)
    k1, k2, k3, k4, k5, k6, k7 = jax.random.split(key, 7)

    word_tab = 0.02 * jax.random.normal(k1, (vocab_size, hidden_size), jnp.float32)
    age_tab = 0.02 * jax.random.normal(k2, (age_vocab_size, hidden_size), jnp.float32)
    posi_tab = init_posi_embedding(max_position_embeddings, hidden_size)
    gamma = 1.0 + 0.1 * jax.random.normal(k3, (hidden_size,), jnp.float32)
    beta = 0.05 * jax.random.normal(k4, (hidden_size,), jnp.float32)

    word_ids = jax.random.randint(k5, (batch, seq), 0, vocab_size, jnp.int32)
    age_ids = jax.random.randint(k6, (batch, seq), 0, age_vocab_size, jnp.int32)
    posi_ids = jnp.broadcast_to(jnp.arange(seq, dtype=jnp.int32)[None, :],
                                (batch, seq))
    seg_ids = jnp.zeros_like(word_ids)

    out = bert_embeddings(word_ids, age_ids, seg_ids, posi_ids,
                          word_tab, age_tab, posi_tab, gamma, beta)
    out = jax.block_until_ready(out)

    ref = jax_reference(word_ids, age_ids, posi_ids,
                        word_tab, age_tab, posi_tab, gamma, beta)
    np.testing.assert_allclose(np.asarray(out), np.asarray(ref),
                               rtol=1e-5, atol=1e-5)
    print("KERNEL_OK")
</pallas_src>

<mosaic_0001>
module attributes {stable_mosaic.version = 11 : i64} {
  func.func @bert_embeddings_kernel(%arg0: i32, %arg1: memref<256x1xi32, #tpu.memory_space<vmem>>, %arg2: memref<256x1xi32, #tpu.memory_space<vmem>>, %arg3: memref<256x1xi32, #tpu.memory_space<vmem>>, %arg4: memref<384x128xf32, #tpu.memory_space<vmem>>, %arg5: memref<1x128xf32, #tpu.memory_space<vmem>>, %arg6: memref<1x128xf32, #tpu.memory_space<vmem>>, %arg7: memref<256x128xf32, #tpu.memory_space<vmem>>) attributes {dimension_semantics = [#tpu.dimension_semantics<parallel>], iteration_bounds = array<i64: 1>, scalar_prefetch = 0 : i64, scratch_operands = 0 : i64, tpu.core_type = #tpu.core_type<tc>, window_params = [{transform_indices = @transform_0, window_bounds = array<i64: 256, 1>}, {transform_indices = @transform_1, window_bounds = array<i64: 256, 1>}, {transform_indices = @transform_2, window_bounds = array<i64: 256, 1>}, {pipeline_mode = #tpu.pipeline_mode<synchronous>, transform_indices = @transform_3, window_bounds = array<i64: 384, 128>}, {pipeline_mode = #tpu.pipeline_mode<synchronous>, transform_indices = @transform_4, window_bounds = array<i64: 1, 128>}, {pipeline_mode = #tpu.pipeline_mode<synchronous>, transform_indices = @transform_5, window_bounds = array<i64: 1, 128>}, {transform_indices = @transform_6, window_bounds = array<i64: 256, 128>}]} {
    %0 = tpu.iota {dimensions = array<i32: 1>} : vector<256x384xi32>
    %c0 = arith.constant 0 : index
    %c0_0 = arith.constant 0 : index
    %1 = vector.load %arg1[%c0, %c0_0] : memref<256x1xi32, #tpu.memory_space<vmem>>, vector<256x1xi32>
    %c0_1 = arith.constant 0 : index
    %c0_2 = arith.constant 0 : index
    %2 = vector.load %arg2[%c0_1, %c0_2] : memref<256x1xi32, #tpu.memory_space<vmem>>, vector<256x1xi32>
    %c0_3 = arith.constant 0 : index
    %c0_4 = arith.constant 0 : index
    %3 = vector.load %arg3[%c0_3, %c0_4] : memref<256x1xi32, #tpu.memory_space<vmem>>, vector<256x1xi32>
    %4 = vector.broadcast %1 : vector<256x1xi32> to vector<256x384xi32>
    %5 = arith.cmpi eq, %0, %4 : vector<256x384xi32>
    %6 = vector.broadcast %2 : vector<256x1xi32> to vector<256x384xi32>
    %7 = arith.cmpi eq, %0, %6 : vector<256x384xi32>
    %8 = arith.ori %5, %7 : vector<256x384xi1>
    %9 = vector.broadcast %3 : vector<256x1xi32> to vector<256x384xi32>
    %10 = arith.cmpi eq, %0, %9 : vector<256x384xi32>
    %11 = arith.ori %8, %10 : vector<256x384xi1>
    %12 = arith.extui %11 : vector<256x384xi1> to vector<256x384xi32>
    %13 = arith.sitofp %12 : vector<256x384xi32> to vector<256x384xf32>
    %c0_5 = arith.constant 0 : index
    %c0_6 = arith.constant 0 : index
    %14 = vector.load %arg4[%c0_5, %c0_6] : memref<384x128xf32, #tpu.memory_space<vmem>>, vector<384x128xf32>
    %cst = arith.constant dense<0.000000e+00> : vector<256x128xf32>
    %15 = tpu.matmul %13, %14, %cst {dimension_numbers = #tpu.dot_dimension_numbers<[1], [0], [0], [1], [0, 0, 1, 1], [], []>} : vector<256x384xf32>, vector<384x128xf32>, vector<256x128xf32> -> vector<256x128xf32>
    %cst_7 = arith.constant dense<0.000000e+00> : vector<256xf32>
    %16 = vector.multi_reduction <add>, %15, %cst_7 [1] : vector<256x128xf32> to vector<256xf32>
    %17 = vector.shape_cast %16 : vector<256xf32> to vector<256x1xf32>
    %cst_8 = arith.constant 1.280000e+02 : f32
    %18 = vector.broadcast %cst_8 : f32 to vector<256x1xf32>
    %19 = arith.divf %17, %18 : vector<256x1xf32>
    %20 = vector.broadcast %19 : vector<256x1xf32> to vector<256x128xf32>
    %21 = arith.subf %15, %20 : vector<256x128xf32>
    %22 = arith.mulf %21, %21 : vector<256x128xf32>
    %cst_9 = arith.constant dense<0.000000e+00> : vector<256xf32>
    %23 = vector.multi_reduction <add>, %22, %cst_9 [1] : vector<256x128xf32> to vector<256xf32>
    %24 = vector.shape_cast %23 : vector<256xf32> to vector<256x1xf32>
    %cst_10 = arith.constant 1.280000e+02 : f32
    %25 = vector.broadcast %cst_10 : f32 to vector<256x1xf32>
    %26 = arith.divf %24, %25 : vector<256x1xf32>
    %cst_11 = arith.constant 9.99999996E-13 : f32
    %27 = vector.broadcast %cst_11 : f32 to vector<256x1xf32>
    %28 = arith.addf %26, %27 : vector<256x1xf32>
    %29 = math.rsqrt %28 : vector<256x1xf32>
    %30 = vector.broadcast %29 : vector<256x1xf32> to vector<256x128xf32>
    %31 = arith.mulf %21, %30 : vector<256x128xf32>
    %c0_12 = arith.constant 0 : index
    %c0_13 = arith.constant 0 : index
    %32 = vector.load %arg5[%c0_12, %c0_13] : memref<1x128xf32, #tpu.memory_space<vmem>>, vector<1x128xf32>
    %33 = vector.broadcast %32 : vector<1x128xf32> to vector<256x128xf32>
    %34 = arith.mulf %31, %33 : vector<256x128xf32>
    %c0_14 = arith.constant 0 : index
    %c0_15 = arith.constant 0 : index
    %35 = vector.load %arg6[%c0_14, %c0_15] : memref<1x128xf32, #tpu.memory_space<vmem>>, vector<1x128xf32>
    %36 = vector.broadcast %35 : vector<1x128xf32> to vector<256x128xf32>
    %37 = arith.addf %34, %36 : vector<256x128xf32>
    %c0_16 = arith.constant 0 : index
    %c0_17 = arith.constant 0 : index
    %38 = vector.load %arg7[%c0_16, %c0_17] : memref<256x128xf32, #tpu.memory_space<vmem>>, vector<256x128xf32>
    tpu.vector_store %arg7[%c0_16, %c0_17], %37 {strides = array<i32>} : memref<256x128xf32, #tpu.memory_space<vmem>>, vector<256x128xf32>,
    return
  }
  func.func @transform_0(%arg0: i32) -> (i32, i32) {
    %c0_i32 = arith.constant 0 : i32
    %c0_i32_0 = arith.constant 0 : i32
    return %arg0, %c0_i32 : i32, i32
  }
  func.func @transform_1(%arg0: i32) -> (i32, i32) {
    %c0_i32 = arith.constant 0 : i32
    %c0_i32_0 = arith.constant 0 : i32
    return %arg0, %c0_i32 : i32, i32
  }
  func.func @transform_2(%arg0: i32) -> (i32, i32) {
    %c0_i32 = arith.constant 0 : i32
    %c0_i32_0 = arith.constant 0 : i32
    return %arg0, %c0_i32 : i32, i32
  }
  func.func @transform_3(%arg0: i32) -> (i32, i32) {
    %c0_i32 = arith.constant 0 : i32
    %c0_i32_0 = arith.constant 0 : i32
    %c0_i32_1 = arith.constant 0 : i32
    return %c0_i32, %c0_i32_0 : i32, i32
  }
  func.func @transform_4(%arg0: i32) -> (i32, i32) {
    %c0_i32 = arith.constant 0 : i32
    %c0_i32_0 = arith.constant 0 : i32
    %c0_i32_1 = arith.constant 0 : i32
    return %c0_i32, %c0_i32_0 : i32, i32
  }
  func.func @transform_5(%arg0: i32) -> (i32, i32) {
    %c0_i32 = arith.constant 0 : i32
    %c0_i32_0 = arith.constant 0 : i32
    %c0_i32_1 = arith.constant 0 : i32
    return %c0_i32, %c0_i32_0 : i32, i32
  }
  func.func @transform_6(%arg0: i32) -> (i32, i32) {
    %c0_i32 = arith.constant 0 : i32
    %c0_i32_0 = arith.constant 0 : i32
    return %arg0, %c0_i32 : i32, i32
  }
}

</mosaic_0001>

<llo_original>
// kernel: bert_embeddings.1
$region0: #{bert_embeddings.1}
  #allocation0 [shape = 'u32[]', space=smem, size = 0x4, offset = 0x4, fixed_abs, tag = 'smem constant byte address 0x4 - core index']
  #allocation1 [shape = 'u32[72,128]{1,0:T(1,128)}', space=vmem, size = 0x9000, scoped, tag = 'internal scratch']
  %s0 = inlined_call_operand.vmem [shape: s32[256,1], index: 0, kind: input, shape index: {}]
  %s1 = inlined_call_operand.vmem [shape: s32[256,1], index: 1, kind: input, shape index: {}]
  %s2 = inlined_call_operand.vmem [shape: s32[256,1], index: 2, kind: input, shape index: {}]
  %s3 = inlined_call_operand.vmem [shape: f32[384,128], index: 3, kind: input, shape index: {}]
  %s4 = inlined_call_operand.vmem [shape: f32[1,128], index: 4, kind: input, shape index: {}]
  %s5 = inlined_call_operand.vmem [shape: f32[1,128], index: 5, kind: input, shape index: {}]
  %s6 = inlined_call_operand.vmem [shape: f32[256,128], index: 6, kind: output, shape index: {}]
  %s7 = sld [smem:[#allocation0]]
  $region34: #{bert_embeddings.1} parent=0
    _
  %s9 = ssub.s32 1, %s7
  %s10 = scalar_select 0, %s9, %s7
  // Predicated region
  $region2: #{bert_embeddings.1} parent=0 // pred_check
    _
  $region3: #{bert_embeddings.1} parent=0 // pred_check_branch
    %12 = sbr.rel (0) target = $region5
  $region4: #{bert_embeddings.1} parent=0 // pred_region
    _
  $region5: #{bert_embeddings.1} parent=0 // pred_fallthru
    _
  // Predicated region
  $region6: #{bert_embeddings.1} parent=0 // pred_check
    _
  $region7: #{bert_embeddings.1} parent=0 // pred_check_branch
    %14 = sbr.rel (0) target = $region9
  $region8: #{bert_embeddings.1} parent=0 // pred_region
    _
  $region9: #{bert_embeddings.1} parent=0 // pred_fallthru
    _
  // Predicated region
  $region10: #{bert_embeddings.1} parent=0 // pred_check
    _
  $region11: #{bert_embeddings.1} parent=0 // pred_check_branch
    %16 = sbr.rel (0) target = $region13
  $region12: #{bert_embeddings.1} parent=0 // pred_region
    _
  $region13: #{bert_embeddings.1} parent=0 // pred_fallthru
    _
  // Predicated region
  $region14: #{bert_embeddings.1} parent=0 // pred_check
    _
  $region15: #{bert_embeddings.1} parent=0 // pred_check_branch
    %18 = sbr.rel (0) target = $region17
  $region16: #{bert_embeddings.1} parent=0 // pred_region
    _
  $region17: #{bert_embeddings.1} parent=0 // pred_fallthru
    _
  // Predicated region
  $region18: #{bert_embeddings.1} parent=0 // pred_check
    _
  $region19: #{bert_embeddings.1} parent=0 // pred_check_branch
    %20 = sbr.rel (0) target = $region21
  $region20: #{bert_embeddings.1} parent=0 // pred_region
    _
  $region21: #{bert_embeddings.1} parent=0 // pred_fallthru
    _
  // Predicated region
  $region22: #{bert_embeddings.1} parent=0 // pred_check
    _
  $region23: #{bert_embeddings.1} parent=0 // pred_check_branch
    %22 = sbr.rel (0) target = $region25
  $region24: #{bert_embeddings.1} parent=0 // pred_region
    _
  $region25: #{bert_embeddings.1} parent=0 // pred_fallthru
    _
  %v23 = vlaneseq
  %v24 = vand.u32 %v23, 127
  %v25 = vadd.s32 %v24, 128
  %v26 = vadd.s32 %v24, 256
  %v27 = vld [vmem:[%s0] sm:$0xff]
  %v28 = vld [vmem:[%s0 + $0x8] sm:$0xff]
  %v29 = vld [vmem:[%s0 + $0x10] sm:$0xff]
  %v30 = vld [vmem:[%s0 + $0x18] sm:$0xff]
  %v31 = vld [vmem:[%s0 + $0x20] sm:$0xff]
  %v32 = vld [vmem:[%s0 + $0x28] sm:$0xff]
  %v33 = vld [vmem:[%s0 + $0x30] sm:$0xff]
  %v34 = vld [vmem:[%s0 + $0x38] sm:$0xff]
  %v35 = vld [vmem:[%s0 + $0x40] sm:$0xff]
  %v36 = vld [vmem:[%s0 + $0x48] sm:$0xff]
  %v37 = vld [vmem:[%s0 + $0x50] sm:$0xff]
  %v38 = vld [vmem:[%s0 + $0x58] sm:$0xff]
  %v39 = vld [vmem:[%s0 + $0x60] sm:$0xff]
  %v40 = vld [vmem:[%s0 + $0x68] sm:$0xff]
  %v41 = vld [vmem:[%s0 + $0x70] sm:$0xff]
  %v42 = vld [vmem:[%s0 + $0x78] sm:$0xff]
  %v43 = vld [vmem:[%s0 + $0x80] sm:$0xff]
  %v44 = vld [vmem:[%s0 + $0x88] sm:$0xff]
  %v45 = vld [vmem:[%s0 + $0x90] sm:$0xff]
  %v46 = vld [vmem:[%s0 + $0x98] sm:$0xff]
  %v47 = vld [vmem:[%s0 + $0xa0] sm:$0xff]
  %v48 = vld [vmem:[%s0 + $0xa8] sm:$0xff]
  %v49 = vld [vmem:[%s0 + $0xb0] sm:$0xff]
  %v50 = vld [vmem:[%s0 + $0xb8] sm:$0xff]
  %v51 = vld [vmem:[%s0 + $0xc0] sm:$0xff]
  %v52 = vld [vmem:[%s0 + $0xc8] sm:$0xff]
  %v53 = vld [vmem:[%s0 + $0xd0] sm:$0xff]
  %v54 = vld [vmem:[%s0 + $0xd8] sm:$0xff]
  %v55 = vld [vmem:[%s0 + $0xe0] sm:$0xff]
  %v56 = vld [vmem:[%s0 + $0xe8] sm:$0xff]
  %v57 = vld [vmem:[%s0 + $0xf0] sm:$0xff]
  %v58 = vld [vmem:[%s0 + $0xf8] sm:$0xff]
  %v59 = vld [vmem:[%s1] sm:$0xff]
  %v60 = vld [vmem:[%s1 + $0x8] sm:$0xff]
  %v61 = vld [vmem:[%s1 + $0x10] sm:$0xff]
  %v62 = vld [vmem:[%s1 + $0x18] sm:$0xff]
  %v63 = vld [vmem:[%s1 + $0x20] sm:$0xff]
  %v64 = vld [vmem:[%s1 + $0x28] sm:$0xff]
  %v65 = vld [vmem:[%s1 + $0x30] sm:$0xff]
  %v66 = vld [vmem:[%s1 + $0x38] sm:$0xff]
  %v67 = vld [vmem:[%s1 + $0x40] sm:$0xff]
  %v68 = vld [vmem:[%s1 + $0x48] sm:$0xff]
  %v69 = vld [vmem:[%s1 + $0x50] sm:$0xff]
  %v70 = vld [vmem:[%s1 + $0x58] sm:$0xff]
  %v71 = vld [vmem:[%s1 + $0x60] sm:$0xff]
  %v72 = vld [vmem:[%s1 + $0x68] sm:$0xff]
  %v73 = vld [vmem:[%s1 + $0x70] sm:$0xff]
  %v74 = vld [vmem:[%s1 + $0x78] sm:$0xff]
  %v75 = vld [vmem:[%s1 + $0x80] sm:$0xff]
  %v76 = vld [vmem:[%s1 + $0x88] sm:$0xff]
  %v77 = vld [vmem:[%s1 + $0x90] sm:$0xff]
  %v78 = vld [vmem:[%s1 + $0x98] sm:$0xff]
  %v79 = vld [vmem:[%s1 + $0xa0] sm:$0xff]
  %v80 = vld [vmem:[%s1 + $0xa8] sm:$0xff]
  %v81 = vld [vmem:[%s1 + $0xb0] sm:$0xff]
  %v82 = vld [vmem:[%s1 + $0xb8] sm:$0xff]
  %v83 = vld [vmem:[%s1 + $0xc0] sm:$0xff]
  %v84 = vld [vmem:[%s1 + $0xc8] sm:$0xff]
  %v85 = vld [vmem:[%s1 + $0xd0] sm:$0xff]
  %v86 = vld [vmem:[%s1 + $0xd8] sm:$0xff]
  %v87 = vld [vmem:[%s1 + $0xe0] sm:$0xff]
  %v88 = vld [vmem:[%s1 + $0xe8] sm:$0xff]
  %v89 = vld [vmem:[%s1 + $0xf0] sm:$0xff]
  %v90 = vld [vmem:[%s1 + $0xf8] sm:$0xff]
  %v91 = vld [vmem:[%s2] sm:$0xff]
  %v92 = vld [vmem:[%s2 + $0x8] sm:$0xff]
  %v93 = vld [vmem:[%s2 + $0x10] sm:$0xff]
  %v94 = vld [vmem:[%s2 + $0x18] sm:$0xff]
  %v95 = vld [vmem:[%s2 + $0x20] sm:$0xff]
  %v96 = vld [vmem:[%s2 + $0x28] sm:$0xff]
  %v97 = vld [vmem:[%s2 + $0x30] sm:$0xff]
  %v98 = vld [vmem:[%s2 + $0x38] sm:$0xff]
  %v99 = vld [vmem:[%s2 + $0x40] sm:$0xff]
  %v100 = vld [vmem:[%s2 + $0x48] sm:$0xff]
  %v101 = vld [vmem:[%s2 + $0x50] sm:$0xff]
  %v102 = vld [vmem:[%s2 + $0x58] sm:$0xff]
  %v103 = vld [vmem:[%s2 + $0x60] sm:$0xff]
  %v104 = vld [vmem:[%s2 + $0x68] sm:$0xff]
  %v105 = vld [vmem:[%s2 + $0x70] sm:$0xff]
  %v106 = vld [vmem:[%s2 + $0x78] sm:$0xff]
  %v107 = vld [vmem:[%s2 + $0x80] sm:$0xff]
  %v108 = vld [vmem:[%s2 + $0x88] sm:$0xff]
  %v109 = vld [vmem:[%s2 + $0x90] sm:$0xff]
  %v110 = vld [vmem:[%s2 + $0x98] sm:$0xff]
  %v111 = vld [vmem:[%s2 + $0xa0] sm:$0xff]
  %v112 = vld [vmem:[%s2 + $0xa8] sm:$0xff]
  %v113 = vld [vmem:[%s2 + $0xb0] sm:$0xff]
  %v114 = vld [vmem:[%s2 + $0xb8] sm:$0xff]
  %v115 = vld [vmem:[%s2 + $0xc0] sm:$0xff]
  %v116 = vld [vmem:[%s2 + $0xc8] sm:$0xff]
  %v117 = vld [vmem:[%s2 + $0xd0] sm:$0xff]
  %v118 = vld [vmem:[%s2 + $0xd8] sm:$0xff]
  %v119 = vld [vmem:[%s2 + $0xe0] sm:$0xff]
  %v120 = vld [vmem:[%s2 + $0xe8] sm:$0xff]
  %v121 = vld [vmem:[%s2 + $0xf0] sm:$0xff]
  %v122 = vld [vmem:[%s2 + $0xf8] sm:$0xff]
  %123 = vset.pattern.permute.xlu0 0
  %124 = vperm.xlu0 %123, %v27
  %v125 = vpop.permute.xlu0 %124
  %126 = vset.pattern.permute.xlu0 0
  %127 = vperm.xlu0 %126, %v28
  %v128 = vpop.permute.xlu0 %127
  %129 = vset.pattern.permute.xlu0 0
  %130 = vperm.xlu0 %129, %v29
  %v131 = vpop.permute.xlu0 %130
  %132 = vset.pattern.permute.xlu0 0
  %133 = vperm.xlu0 %132, %v30
  %v134 = vpop.permute.xlu0 %133
  %135 = vset.pattern.permute.xlu0 0
  %136 = vperm.xlu0 %135, %v31
  %v137 = vpop.permute.xlu0 %136
  %138 = vset.pattern.permute.xlu0 0
  %139 = vperm.xlu0 %138, %v32
  %v140 = vpop.permute.xlu0 %139
  %141 = vset.pattern.permute.xlu0 0
  %142 = vperm.xlu0 %141, %v33
  %v143 = vpop.permute.xlu0 %142
  %144 = vset.pattern.permute.xlu0 0
  %145 = vperm.xlu0 %144, %v34
  %v146 = vpop.permute.xlu0 %145
  %147 = vset.pattern.permute.xlu0 0
  %148 = vperm.xlu0 %147, %v35
  %v149 = vpop.permute.xlu0 %148
  %150 = vset.pattern.permute.xlu0 0
  %151 = vperm.xlu0 %150, %v36
  %v152 = vpop.permute.xlu0 %151
  %153 = vset.pattern.permute.xlu0 0
  %154 = vperm.xlu0 %153, %v37
  %v155 = vpop.permute.xlu0 %154
  %156 = vset.pattern.permute.xlu0 0
  %157 = vperm.xlu0 %156, %v38
  %v158 = vpop.permute.xlu0 %157
  %159 = vset.pattern.permute.xlu0 0
  %160 = vperm.xlu0 %159, %v39
  %v161 = vpop.permute.xlu0 %160
  %162 = vset.pattern.permute.xlu0 0
  %163 = vperm.xlu0 %162, %v40
  %v164 = vpop.permute.xlu0 %163
  %165 = vset.pattern.permute.xlu0 0
  %166 = vperm.xlu0 %165, %v41
  %v167 = vpop.permute.xlu0 %166
  %168 = vset.pattern.permute.xlu0 0
  %169 = vperm.xlu0 %168, %v42
  %v170 = vpop.permute.xlu0 %169
  %171 = vset.pattern.permute.xlu0 0
  %172 = vperm.xlu0 %171, %v43
  %v173 = vpop.permute.xlu0 %172
  %174 = vset.pattern.permute.xlu0 0
  %175 = vperm.xlu0 %174, %v44
  %v176 = vpop.permute.xlu0 %175
  %177 = vset.pattern.permute.xlu0 0
  %178 = vperm.xlu0 %177, %v45
  %v179 = vpop.permute.xlu0 %178
  %180 = vset.pattern.permute.xlu0 0
  %181 = vperm.xlu0 %180, %v46
  %v182 = vpop.permute.xlu0 %181
  %183 = vset.pattern.permute.xlu0 0
  %184 = vperm.xlu0 %183, %v47
  %v185 = vpop.permute.xlu0 %184
  %186 = vset.pattern.permute.xlu0 0
  %187 = vperm.xlu0 %186, %v48
  %v188 = vpop.permute.xlu0 %187
  %189 = vset.pattern.permute.xlu0 0
  %190 = vperm.xlu0 %189, %v49
  %v191 = vpop.permute.xlu0 %190
  %192 = vset.pattern.permute.xlu0 0
  %193 = vperm.xlu0 %192, %v50
  %v194 = vpop.permute.xlu0 %193
  %195 = vset.pattern.permute.xlu0 0
  %196 = vperm.xlu0 %195, %v51
  %v197 = vpop.permute.xlu0 %196
  %198 = vset.pattern.permute.xlu0 0
  %199 = vperm.xlu0 %198, %v52
  %v200 = vpop.permute.xlu0 %199
  %201 = vset.pattern.permute.xlu0 0
  %202 = vperm.xlu0 %201, %v53
  %v203 = vpop.permute.xlu0 %202
  %204 = vset.pattern.permute.xlu0 0
  %205 = vperm.xlu0 %204, %v54
  %v206 = vpop.permute.xlu0 %205
  %207 = vset.pattern.permute.xlu0 0
  %208 = vperm.xlu0 %207, %v55
  %v209 = vpop.permute.xlu0 %208
  %210 = vset.pattern.permute.xlu0 0
  %211 = vperm.xlu0 %210, %v56
  %v212 = vpop.permute.xlu0 %211
  %213 = vset.pattern.permute.xlu0 0
  %214 = vperm.xlu0 %213, %v57
  %v215 = vpop.permute.xlu0 %214
  %216 = vset.pattern.permute.xlu0 0
  %217 = vperm.xlu0 %216, %v58
  %v218 = vpop.permute.xlu0 %217
  %vm219 = vcmp.eq.s32.totalorder %v24, %v125
  %vm220 = vcmp.eq.s32.totalorder %v25, %v125
  %vm221 = vcmp.eq.s32.totalorder %v26, %v125
  %vm222 = vcmp.eq.s32.totalorder %v24, %v128
  %vm223 = vcmp.eq.s32.totalorder %v25, %v128
  %vm224 = vcmp.eq.s32.totalorder %v26, %v128
  %vm225 = vcmp.eq.s32.totalorder %v24, %v131
  %vm226 = vcmp.eq.s32.totalorder %v25, %v131
  %vm227 = vcmp.eq.s32.totalorder %v26, %v131
  %vm228 = vcmp.eq.s32.totalorder %v24, %v134
  %vm229 = vcmp.eq.s32.totalorder %v25, %v134
  %vm230 = vcmp.eq.s32.totalorder %v26, %v134
  %vm231 = vcmp.eq.s32.totalorder %v24, %v137
  %vm232 = vcmp.eq.s32.totalorder %v25, %v137
  %vm233 = vcmp.eq.s32.totalorder %v26, %v137
  %vm234 = vcmp.eq.s32.totalorder %v24, %v140
  %vm235 = vcmp.eq.s32.totalorder %v25, %v140
  %vm236 = vcmp.eq.s32.totalorder %v26, %v140
  %vm237 = vcmp.eq.s32.totalorder %v24, %v143
  %vm238 = vcmp.eq.s32.totalorder %v25, %v143
  %vm239 = vcmp.eq.s32.totalorder %v26, %v143
  %vm240 = vcmp.eq.s32.totalorder %v24, %v146
  %vm241 = vcmp.eq.s32.totalorder %v25, %v146
  %vm242 = vcmp.eq.s32.totalorder %v26, %v146
  %vm243 = vcmp.eq.s32.totalorder %v24, %v149
  %vm244 = vcmp.eq.s32.totalorder %v25, %v149
  %vm245 = vcmp.eq.s32.totalorder %v26, %v149
  %vm246 = vcmp.eq.s32.totalorder %v24, %v152
  %vm247 = vcmp.eq.s32.totalorder %v25, %v152
  %vm248 = vcmp.eq.s32.totalorder %v26, %v152
  %vm249 = vcmp.eq.s32.totalorder %v24, %v155
  %vm250 = vcmp.eq.s32.totalorder %v25, %v155
  %vm251 = vcmp.eq.s32.totalorder %v26, %v155
  %vm252 = vcmp.eq.s32.totalorder %v24, %v158
  %vm253 = vcmp.eq.s32.totalorder %v25, %v158
  %vm254 = vcmp.eq.s32.totalorder %v26, %v158
  %vm255 = vcmp.eq.s32.totalorder %v24, %v161
  %vm256 = vcmp.eq.s32.totalorder %v25, %v161
  %vm257 = vcmp.eq.s32.totalorder %v26, %v161
  %vm258 = vcmp.eq.s32.totalorder %v24, %v164
  %vm259 = vcmp.eq.s32.totalorder %v25, %v164
  %vm260 = vcmp.eq.s32.totalorder %v26, %v164
  %vm261 = vcmp.eq.s32.totalorder %v24, %v167
  %vm262 = vcmp.eq.s32.totalorder %v25, %v167
  %vm263 = vcmp.eq.s32.totalorder %v26, %v167
  %vm264 = vcmp.eq.s32.totalorder %v24, %v170
  %vm265 = vcmp.eq.s32.totalorder %v25, %v170
  %vm266 = vcmp.eq.s32.totalorder %v26, %v170
  %vm267 = vcmp.eq.s32.totalorder %v24, %v173
  %vm268 = vcmp.eq.s32.totalorder %v25, %v173
  %vm269 = vcmp.eq.s32.totalorder %v26, %v173
  %vm270 = vcmp.eq.s32.totalorder %v24, %v176
  %vm271 = vcmp.eq.s32.totalorder %v25, %v176
  %vm272 = vcmp.eq.s32.totalorder %v26, %v176
  %vm273 = vcmp.eq.s32.totalorder %v24, %v179
  %vm274 = vcmp.eq.s32.totalorder %v25, %v179
  %vm275 = vcmp.eq.s32.totalorder %v26, %v179
  %vm276 = vcmp.eq.s32.totalorder %v24, %v182
  %vm277 = vcmp.eq.s32.totalorder %v25, %v182
  %vm278 = vcmp.eq.s32.totalorder %v26, %v182
  %vm279 = vcmp.eq.s32.totalorder %v24, %v185
  %vm280 = vcmp.eq.s32.totalorder %v25, %v185
  %vm281 = vcmp.eq.s32.totalorder %v26, %v185
  %vm282 = vcmp.eq.s32.totalorder %v24, %v188
  %vm283 = vcmp.eq.s32.totalorder %v25, %v188
  %vm284 = vcmp.eq.s32.totalorder %v26, %v188
  %vm285 = vcmp.eq.s32.totalorder %v24, %v191
  %vm286 = vcmp.eq.s32.totalorder %v25, %v191
  %vm287 = vcmp.eq.s32.totalorder %v26, %v191
  %vm288 = vcmp.eq.s32.totalorder %v24, %v194
  %vm289 = vcmp.eq.s32.totalorder %v25, %v194
  %vm290 = vcmp.eq.s32.totalorder %v26, %v194
  %vm291 = vcmp.eq.s32.totalorder %v24, %v197
  %vm292 = vcmp.eq.s32.totalorder %v25, %v197
  %vm293 = vcmp.eq.s32.totalorder %v26, %v197
  %vm294 = vcmp.eq.s32.totalorder %v24, %v200
  %vm295 = vcmp.eq.s32.totalorder %v25, %v200
  %vm296 = vcmp.eq.s32.totalorder %v26, %v200
  %vm297 = vcmp.eq.s32.totalorder %v24, %v203
  %vm298 = vcmp.eq.s32.totalorder %v25, %v203
  %vm299 = vcmp.eq.s32.totalorder %v26, %v203
  %vm300 = vcmp.eq.s32.totalorder %v24, %v206
  %vm301 = vcmp.eq.s32.totalorder %v25, %v206
  %vm302 = vcmp.eq.s32.totalorder %v26, %v206
  %vm303 = vcmp.eq.s32.totalorder %v24, %v209
  %vm304 = vcmp.eq.s32.totalorder %v25, %v209
  %vm305 = vcmp.eq.s32.totalorder %v26, %v209
  %vm306 = vcmp.eq.s32.totalorder %v24, %v212
  %vm307 = vcmp.eq.s32.totalorder %v25, %v212
  %vm308 = vcmp.eq.s32.totalorder %v26, %v212
  %vm309 = vcmp.eq.s32.totalorder %v24, %v215
  %vm310 = vcmp.eq.s32.totalorder %v25, %v215
  %vm311 = vcmp.eq.s32.totalorder %v26, %v215
  %vm312 = vcmp.eq.s32.totalorder %v24, %v218
  %vm313 = vcmp.eq.s32.totalorder %v25, %v218
  %vm314 = vcmp.eq.s32.totalorder %v26, %v218
  %315 = vset.pattern.permute.xlu0 0
  %316 = vperm.xlu0 %315, %v59
  %v317 = vpop.permute.xlu0 %316
  %318 = vset.pattern.permute.xlu0 0
  %319 = vperm.xlu0 %318, %v60
  %v320 = vpop.permute.xlu0 %319
  %321 = vset.pattern.permute.xlu0 0
  %322 = vperm.xlu0 %321, %v61
  %v323 = vpop.permute.xlu0 %322
  %324 = vset.pattern.permute.xlu0 0
  %325 = vperm.xlu0 %324, %v62
  %v326 = vpop.permute.xlu0 %325
  %327 = vset.pattern.permute.xlu0 0
  %328 = vperm.xlu0 %327, %v63
  %v329 = vpop.permute.xlu0 %328
  %330 = vset.pattern.permute.xlu0 0
  %331 = vperm.xlu0 %330, %v64
  %v332 = vpop.permute.xlu0 %331
  %333 = vset.pattern.permute.xlu0 0
  %334 = vperm.xlu0 %333, %v65
  %v335 = vpop.permute.xlu0 %334
  %336 = vset.pattern.permute.xlu0 0
  %337 = vperm.xlu0 %336, %v66
  %v338 = vpop.permute.xlu0 %337
  %339 = vset.pattern.permute.xlu0 0
  %340 = vperm.xlu0 %339, %v67
  %v341 = vpop.permute.xlu0 %340
  %342 = vset.pattern.permute.xlu0 0
  %343 = vperm.xlu0 %342, %v68
  %v344 = vpop.permute.xlu0 %343
  %345 = vset.pattern.permute.xlu0 0
  %346 = vperm.xlu0 %345, %v69
  %v347 = vpop.permute.xlu0 %346
  %348 = vset.pattern.permute.xlu0 0
  %349 = vperm.xlu0 %348, %v70
  %v350 = vpop.permute.xlu0 %349
  %351 = vset.pattern.permute.xlu0 0
  %352 = vperm.xlu0 %351, %v71
  %v353 = vpop.permute.xlu0 %352
  %354 = vset.pattern.permute.xlu0 0
  %355 = vperm.xlu0 %354, %v72
  %v356 = vpop.permute.xlu0 %355
  %357 = vset.pattern.permute.xlu0 0
  %358 = vperm.xlu0 %357, %v73
  %v359 = vpop.permute.xlu0 %358
  %360 = vset.pattern.permute.xlu0 0
  %361 = vperm.xlu0 %360, %v74
  %v362 = vpop.permute.xlu0 %361
  %363 = vset.pattern.permute.xlu0 0
  %364 = vperm.xlu0 %363, %v75
  %v365 = vpop.permute.xlu0 %364
  %366 = vset.pattern.permute.xlu0 0
  %367 = vperm.xlu0 %366, %v76
  %v368 = vpop.permute.xlu0 %367
  %369 = vset.pattern.permute.xlu0 0
  %370 = vperm.xlu0 %369, %v77
  %v371 = vpop.permute.xlu0 %370
  %372 = vset.pattern.permute.xlu0 0
  %373 = vperm.xlu0 %372, %v78
  %v374 = vpop.permute.xlu0 %373
  %375 = vset.pattern.permute.xlu0 0
  %376 = vperm.xlu0 %375, %v79
  %v377 = vpop.permute.xlu0 %376
  %378 = vset.pattern.permute.xlu0 0
  %379 = vperm.xlu0 %378, %v80
  %v380 = vpop.permute.xlu0 %379
  %381 = vset.pattern.permute.xlu0 0
  %382 = vperm.xlu0 %381, %v81
  %v383 = vpop.permute.xlu0 %382
  %384 = vset.pattern.permute.xlu0 0
  %385 = vperm.xlu0 %384, %v82
  %v386 = vpop.permute.xlu0 %385
  %387 = vset.pattern.permute.xlu0 0
  %388 = vperm.xlu0 %387, %v83
  %v389 = vpop.permute.xlu0 %388
  %390 = vset.pattern.permute.xlu0 0
  %391 = vperm.xlu0 %390, %v84
  %v392 = vpop.permute.xlu0 %391
  %393 = vset.pattern.permute.xlu0 0
  %394 = vperm.xlu0 %393, %v85
  %v395 = vpop.permute.xlu0 %394
  %396 = vset.pattern.permute.xlu0 0
  %397 = vperm.xlu0 %396, %v86
  %v398 = vpop.permute.xlu0 %397
  %399 = vset.pattern.permute.xlu0 0
  %400 = vperm.xlu0 %399, %v87
  %v401 = vpop.permute.xlu0 %400
  %402 = vset.pattern.permute.xlu0 0
  %403 = vperm.xlu0 %402, %v88
  %v404 = vpop.permute.xlu0 %403
  %405 = vset.pattern.permute.xlu0 0
  %406 = vperm.xlu0 %405, %v89
  %v407 = vpop.permute.xlu0 %406
  %408 = vset.pattern.permute.xlu0 0
  %409 = vperm.xlu0 %408, %v90
  %v410 = vpop.permute.xlu0 %409
  %vm411 = vcmp.eq.s32.totalorder %v24, %v317
  %vm412 = vcmp.eq.s32.totalorder %v25, %v317
  %vm413 = vcmp.eq.s32.totalorder %v26, %v317
  %vm414 = vcmp.eq.s32.totalorder %v24, %v320
  %vm415 = vcmp.eq.s32.totalorder %v25, %v320
  %vm416 = vcmp.eq.s32.totalorder %v26, %v320
  %vm417 = vcmp.eq.s32.totalorder %v24, %v323
  %vm418 = vcmp.eq.s32.totalorder %v25, %v323
  %vm419 = vcmp.eq.s32.totalorder %v26, %v323
  %vm420 = vcmp.eq.s32.totalorder %v24, %v326
  %vm421 = vcmp.eq.s32.totalorder %v25, %v326
  %vm422 = vcmp.eq.s32.totalorder %v26, %v326
  %vm423 = vcmp.eq.s32.totalorder %v24, %v329
  %vm424 = vcmp.eq.s32.totalorder %v25, %v329
  %vm425 = vcmp.eq.s32.totalorder %v26, %v329
  %vm426 = vcmp.eq.s32.totalorder %v24, %v332
  %vm427 = vcmp.eq.s32.totalorder %v25, %v332
  %vm428 = vcmp.eq.s32.totalorder %v26, %v332
  %vm429 = vcmp.eq.s32.totalorder %v24, %v335
  %vm430 = vcmp.eq.s32.totalorder %v25, %v335
  %vm431 = vcmp.eq.s32.totalorder %v26, %v335
  %vm432 = vcmp.eq.s32.totalorder %v24, %v338
  %vm433 = vcmp.eq.s32.totalorder %v25, %v338
  %vm434 = vcmp.eq.s32.totalorder %v26, %v338
  %vm435 = vcmp.eq.s32.totalorder %v24, %v341
  %vm436 = vcmp.eq.s32.totalorder %v25, %v341
  %vm437 = vcmp.eq.s32.totalorder %v26, %v341
  %vm438 = vcmp.eq.s32.totalorder %v24, %v344
  %vm439 = vcmp.eq.s32.totalorder %v25, %v344
  %vm440 = vcmp.eq.s32.totalorder %v26, %v344
  %vm441 = vcmp.eq.s32.totalorder %v24, %v347
  %vm442 = vcmp.eq.s32.totalorder %v25, %v347
  %vm443 = vcmp.eq.s32.totalorder %v26, %v347
  %vm444 = vcmp.eq.s32.totalorder %v24, %v350
  %vm445 = vcmp.eq.s32.totalorder %v25, %v350
  %vm446 = vcmp.eq.s32.totalorder %v26, %v350
  %vm447 = vcmp.eq.s32.totalorder %v24, %v353
  %vm448 = vcmp.eq.s32.totalorder %v25, %v353
  %vm449 = vcmp.eq.s32.totalorder %v26, %v353
  %vm450 = vcmp.eq.s32.totalorder %v24, %v356
  %vm451 = vcmp.eq.s32.totalorder %v25, %v356
  %vm452 = vcmp.eq.s32.totalorder %v26, %v356
  %vm453 = vcmp.eq.s32.totalorder %v24, %v359
  %vm454 = vcmp.eq.s32.totalorder %v25, %v359
  %vm455 = vcmp.eq.s32.totalorder %v26, %v359
  %vm456 = vcmp.eq.s32.totalorder %v24, %v362
  %vm457 = vcmp.eq.s32.totalorder %v25, %v362
  %vm458 = vcmp.eq.s32.totalorder %v26, %v362
  %vm459 = vcmp.eq.s32.totalorder %v24, %v365
  %vm460 = vcmp.eq.s32.totalorder %v25, %v365
  %vm461 = vcmp.eq.s32.totalorder %v26, %v365
  %vm462 = vcmp.eq.s32.totalorder %v24, %v368
  %vm463 = vcmp.eq.s32.totalorder %v25, %v368
  %vm464 = vcmp.eq.s32.totalorder %v26, %v368
  %vm465 = vcmp.eq.s32.totalorder %v24, %v371
  %vm466 = vcmp.eq.s32.totalorder %v25, %v371
  %vm467 = vcmp.eq.s32.totalorder %v26, %v371
  %vm468 = vcmp.eq.s32.totalorder %v24, %v374
  %vm469 = vcmp.eq.s32.totalorder %v25, %v374
  %vm470 = vcmp.eq.s32.totalorder %v26, %v374
  %vm471 = vcmp.eq.s32.totalorder %v24, %v377
  %vm472 = vcmp.eq.s32.totalorder %v25, %v377
  %vm473 = vcmp.eq.s32.totalorder %v26, %v377
  %vm474 = vcmp.eq.s32.totalorder %v24, %v380
  %vm475 = vcmp.eq.s32.totalorder %v25, %v380
  %vm476 = vcmp.eq.s32.totalorder %v26, %v380
  %vm477 = vcmp.eq.s32.totalorder %v24, %v383
  %vm478 = vcmp.eq.s32.totalorder %v25, %v383
  %vm479 = vcmp.eq.s32.totalorder %v26, %v383
  %vm480 = vcmp.eq.s32.totalorder %v24, %v386
  %vm481 = vcmp.eq.s32.totalorder %v25, %v386
  %vm482 = vcmp.eq.s32.totalorder %v26, %v386
  %vm483 = vcmp.eq.s32.totalorder %v24, %v389
  %vm484 = vcmp.eq.s32.totalorder %v25, %v389
  %vm485 = vcmp.eq.s32.totalorder %v26, %v389
  %vm486 = vcmp.eq.s32.totalorder %v24, %v392
  %vm487 = vcmp.eq.s32.totalorder %v25, %v392
  %vm488 = vcmp.eq.s32.totalorder %v26, %v392
  %vm489 = vcmp.eq.s32.totalorder %v24, %v395
  %vm490 = vcmp.eq.s32.totalorder %v25, %v395
  %vm491 = vcmp.eq.s32.totalorder %v26, %v395
  %vm492 = vcmp.eq.s32.totalorder %v24, %v398
  %vm493 = vcmp.eq.s32.totalorder %v25, %v398
  %vm494 = vcmp.eq.s32.totalorder %v26, %v398
  %vm495 = vcmp.eq.s32.totalorder %v24, %v401
  %vm496 = vcmp.eq.s32.totalorder %v25, %v401
  %vm497 = vcmp.eq.s32.totalorder %v26, %v401
  %vm498 = vcmp.eq.s32.totalorder %v24, %v404
  %vm499 = vcmp.eq.s32.totalorder %v25, %v404
  %vm500 = vcmp.eq.s32.totalorder %v26, %v404
  %vm501 = vcmp.eq.s32.totalorder %v24, %v407
  %vm502 = vcmp.eq.s32.totalorder %v25, %v407
  %vm503 = vcmp.eq.s32.totalorder %v26, %v407
  %vm504 = vcmp.eq.s32.totalorder %v24, %v410
  %vm505 = vcmp.eq.s32.totalorder %v25, %v410
  %vm506 = vcmp.eq.s32.totalorder %v26, %v410
  %vm507 = vmor %vm219, %vm411
  %vm508 = vmor %vm220, %vm412
  %vm509 = vmor %vm221, %vm413
  %vm510 = vmor %vm222, %vm414
  %vm511 = vmor %vm223, %vm415
  %vm512 = vmor %vm224, %vm416
  %vm513 = vmor %vm225, %vm417
  %vm514 = vmor %vm226, %vm418
  %vm515 = vmor %vm227, %vm419
  %vm516 = vmor %vm228, %vm420
  %vm517 = vmor %vm229, %vm421
  %vm518 = vmor %vm230, %vm422
  %vm519 = vmor %vm231, %vm423
  %vm520 = vmor %vm232, %vm424
  %vm521 = vmor %vm233, %vm425
  %vm522 = vmor %vm234, %vm426
  %vm523 = vmor %vm235, %vm427
  %vm524 = vmor %vm236, %vm428
  %vm525 = vmor %vm237, %vm429
  %vm526 = vmor %vm238, %vm430
  %vm527 = vmor %vm239, %vm431
  %vm528 = vmor %vm240, %vm432
  %vm529 = vmor %vm241, %vm433
  %vm530 = vmor %vm242, %vm434
  %vm531 = vmor %vm243, %vm435
  %vm532 = vmor %vm244, %vm436
  %vm533 = vmor %vm245, %vm437
  %vm534 = vmor %vm246, %vm438
  %vm535 = vmor %vm247, %vm439
  %vm536 = vmor %vm248, %vm440
  %vm537 = vmor %vm249, %vm441
  %vm538 = vmor %vm250, %vm442
  %vm539 = vmor %vm251, %vm443
  %vm540 = vmor %vm252, %vm444
  %vm541 = vmor %vm253, %vm445
  %vm542 = vmor %vm254, %vm446
  %vm543 = vmor %vm255, %vm447
  %vm544 = vmor %vm256, %vm448
  %vm545 = vmor %vm257, %vm449
  %vm546 = vmor %vm258, %vm450
  %vm547 = vmor %vm259, %vm451
  %vm548 = vmor %vm260, %vm452
  %vm549 = vmor %vm261, %vm453
  %vm550 = vmor %vm262, %vm454
  %vm551 = vmor %vm263, %vm455
  %vm552 = vmor %vm264, %vm456
  %vm553 = vmor %vm265, %vm457
  %vm554 = vmor %vm266, %vm458
  %vm555 = vmor %vm267, %vm459
  %vm556 = vmor %vm268, %vm460
  %vm557 = vmor %vm269, %vm461
  %vm558 = vmor %vm270, %vm462
  %vm559 = vmor %vm271, %vm463
  %vm560 = vmor %vm272, %vm464
  %vm561 = vmor %vm273, %vm465
  %vm562 = vmor %vm274, %vm466
  %vm563 = vmor %vm275, %vm467
  %vm564 = vmor %vm276, %vm468
  %vm565 = vmor %vm277, %vm469
  %vm566 = vmor %vm278, %vm470
  %vm567 = vmor %vm279, %vm471
  %vm568 = vmor %vm280, %vm472
  %vm569 = vmor %vm281, %vm473
  %vm570 = vmor %vm282, %vm474
  %vm571 = vmor %vm283, %vm475
  %vm572 = vmor %vm284, %vm476
  %vm573 = vmor %vm285, %vm477
  %vm574 = vmor %vm286, %vm478
  %vm575 = vmor %vm287, %vm479
  %vm576 = vmor %vm288, %vm480
  %vm577 = vmor %vm289, %vm481
  %vm578 = vmor %vm290, %vm482
  %vm579 = vmor %vm291, %vm483
  %vm580 = vmor %vm292, %vm484
  %vm581 = vmor %vm293, %vm485
  %vm582 = vmor %vm294, %vm486
  %vm583 = vmor %vm295, %vm487
  %vm584 = vmor %vm296, %vm488
  %vm585 = vmor %vm297, %vm489
  %vm586 = vmor %vm298, %vm490
  %vm587 = vmor %vm299, %vm491
  %vm588 = vmor %vm300, %vm492
  %vm589 = vmor %vm301, %vm493
  %vm590 = vmor %vm302, %vm494
  %vm591 = vmor %vm303, %vm495
  %vm592 = vmor %vm304, %vm496
  %vm593 = vmor %vm305, %vm497
  %vm594 = vmor %vm306, %vm498
  %vm595 = vmor %vm307, %vm499
  %vm596 = vmor %vm308, %vm500
  %vm597 = vmor %vm309, %vm501
  %vm598 = vmor %vm310, %vm502
  %vm599 = vmor %vm311, %vm503
  %vm600 = vmor %vm312, %vm504
  %vm601 = vmor %vm313, %vm505
  %vm602 = vmor %vm314, %vm506
  %603 = vset.pattern.permute.xlu0 0
  %604 = vperm.xlu0 %603, %v91
  %v605 = vpop.permute.xlu0 %604
  %606 = vset.pattern.permute.xlu0 0
  %607 = vperm.xlu0 %606, %v92
  %v608 = vpop.permute.xlu0 %607
  %609 = vset.pattern.permute.xlu0 0
  %610 = vperm.xlu0 %609, %v93
  %v611 = vpop.permute.xlu0 %610
  %612 = vset.pattern.permute.xlu0 0
  %613 = vperm.xlu0 %612, %v94
  %v614 = vpop.permute.xlu0 %613
  %615 = vset.pattern.permute.xlu0 0
  %616 = vperm.xlu0 %615, %v95
  %v617 = vpop.permute.xlu0 %616
  %618 = vset.pattern.permute.xlu0 0
  %619 = vperm.xlu0 %618, %v96
  %v620 = vpop.permute.xlu0 %619
  %621 = vset.pattern.permute.xlu0 0
  %622 = vperm.xlu0 %621, %v97
  %v623 = vpop.permute.xlu0 %622
  %624 = vset.pattern.permute.xlu0 0
  %625 = vperm.xlu0 %624, %v98
  %v626 = vpop.permute.xlu0 %625
  %627 = vset.pattern.permute.xlu0 0
  %628 = vperm.xlu0 %627, %v99
  %v629 = vpop.permute.xlu0 %628
  %630 = vset.pattern.permute.xlu0 0
  %631 = vperm.xlu0 %630, %v100
  %v632 = vpop.permute.xlu0 %631
  %633 = vset.pattern.permute.xlu0 0
  %634 = vperm.xlu0 %633, %v101
  %v635 = vpop.permute.xlu0 %634
  %636 = vset.pattern.permute.xlu0 0
  %637 = vperm.xlu0 %636, %v102
  %v638 = vpop.permute.xlu0 %637
  %639 = vset.pattern.permute.xlu0 0
  %640 = vperm.xlu0 %639, %v103
  %v641 = vpop.permute.xlu0 %640
  %642 = vset.pattern.permute.xlu0 0
  %643 = vperm.xlu0 %642, %v104
  %v644 = vpop.permute.xlu0 %643
  %645 = vset.pattern.permute.xlu0 0
  %646 = vperm.xlu0 %645, %v105
  %v647 = vpop.permute.xlu0 %646
  %648 = vset.pattern.permute.xlu0 0
  %649 = vperm.xlu0 %648, %v106
  %v650 = vpop.permute.xlu0 %649
  %651 = vset.pattern.permute.xlu0 0
  %652 = vperm.xlu0 %651, %v107
  %v653 = vpop.permute.xlu0 %652
  %654 = vset.pattern.permute.xlu0 0
  %655 = vperm.xlu0 %654, %v108
  %v656 = vpop.permute.xlu0 %655
  %657 = vset.pattern.permute.xlu0 0
  %658 = vperm.xlu0 %657, %v109
  %v659 = vpop.permute.xlu0 %658
  %660 = vset.pattern.permute.xlu0 0
  %661 = vperm.xlu0 %660, %v110
  %v662 = vpop.permute.xlu0 %661
  %663 = vset.pattern.permute.xlu0 0
  %664 = vperm.xlu0 %663, %v111
  %v665 = vpop.permute.xlu0 %664
  %666 = vset.pattern.permute.xlu0 0
  %667 = vperm.xlu0 %666, %v112
  %v668 = vpop.permute.xlu0 %667
  %669 = vset.pattern.permute.xlu0 0
  %670 = vperm.xlu0 %669, %v113
  %v671 = vpop.permute.xlu0 %670
  %672 = vset.pattern.permute.xlu0 0
  %673 = vperm.xlu0 %672, %v114
  %v674 = vpop.permute.xlu0 %673
  %675 = vset.pattern.permute.xlu0 0
  %676 = vperm.xlu0 %675, %v115
  %v677 = vpop.permute.xlu0 %676
  %678 = vset.pattern.permute.xlu0 0
  %679 = vperm.xlu0 %678, %v116
  %v680 = vpop.permute.xlu0 %679
  %681 = vset.pattern.permute.xlu0 0
  %682 = vperm.xlu0 %681, %v117
  %v683 = vpop.permute.xlu0 %682
  %684 = vset.pattern.permute.xlu0 0
  %685 = vperm.xlu0 %684, %v118
  %v686 = vpop.permute.xlu0 %685
  %687 = vset.pattern.permute.xlu0 0
  %688 = vperm.xlu0 %687, %v119
  %v689 = vpop.permute.xlu0 %688
  %690 = vset.pattern.permute.xlu0 0
  %691 = vperm.xlu0 %690, %v120
  %v692 = vpop.permute.xlu0 %691
  %693 = vset.pattern.permute.xlu0 0
  %694 = vperm.xlu0 %693, %v121
  %v695 = vpop.permute.xlu0 %694
  %696 = vset.pattern.permute.xlu0 0
  %697 = vperm.xlu0 %696, %v122
  %v698 = vpop.permute.xlu0 %697
  %vm699 = vcmp.eq.s32.totalorder %v24, %v605
  %vm700 = vcmp.eq.s32.totalorder %v25, %v605
  %vm701 = vcmp.eq.s32.totalorder %v26, %v605
  %vm702 = vcmp.eq.s32.totalorder %v24, %v608
  %vm703 = vcmp.eq.s32.totalorder %v25, %v608
  %vm704 = vcmp.eq.s32.totalorder %v26, %v608
  %vm705 = vcmp.eq.s32.totalorder %v24, %v611
  %vm706 = vcmp.eq.s32.totalorder %v25, %v611
  %vm707 = vcmp.eq.s32.totalorder %v26, %v611
  %vm708 = vcmp.eq.s32.totalorder %v24, %v614
  %vm709 = vcmp.eq.s32.totalorder %v25, %v614
  %vm710 = vcmp.eq.s32.totalorder %v26, %v614
  %vm711 = vcmp.eq.s32.totalorder %v24, %v617
  %vm712 = vcmp.eq.s32.totalorder %v25, %v617
  %vm713 = vcmp.eq.s32.totalorder %v26, %v617
  %vm714 = vcmp.eq.s32.totalorder %v24, %v620
  %vm715 = vcmp.eq.s32.totalorder %v25, %v620
  %vm716 = vcmp.eq.s32.totalorder %v26, %v620
  %vm717 = vcmp.eq.s32.totalorder %v24, %v623
  %vm718 = vcmp.eq.s32.totalorder %v25, %v623
  %vm719 = vcmp.eq.s32.totalorder %v26, %v623
  %vm720 = vcmp.eq.s32.totalorder %v24, %v626
  %vm721 = vcmp.eq.s32.totalorder %v25, %v626
  %vm722 = vcmp.eq.s32.totalorder %v26, %v626
  %vm723 = vcmp.eq.s32.totalorder %v24, %v629
  %vm724 = vcmp.eq.s32.totalorder %v25, %v629
  %vm725 = vcmp.eq.s32.totalorder %v26, %v629
  %vm726 = vcmp.eq.s32.totalorder %v24, %v632
  %vm727 = vcmp.eq.s32.totalorder %v25, %v632
  %vm728 = vcmp.eq.s32.totalorder %v26, %v632
  %vm729 = vcmp.eq.s32.totalorder %v24, %v635
  %vm730 = vcmp.eq.s32.totalorder %v25, %v635
  %vm731 = vcmp.eq.s32.totalorder %v26, %v635
  %vm732 = vcmp.eq.s32.totalorder %v24, %v638
  %vm733 = vcmp.eq.s32.totalorder %v25, %v638
  %vm734 = vcmp.eq.s32.totalorder %v26, %v638
  %vm735 = vcmp.eq.s32.totalorder %v24, %v641
  %vm736 = vcmp.eq.s32.totalorder %v25, %v641
  %vm737 = vcmp.eq.s32.totalorder %v26, %v641
  %vm738 = vcmp.eq.s32.totalorder %v24, %v644
  %vm739 = vcmp.eq.s32.totalorder %v25, %v644
  %vm740 = vcmp.eq.s32.totalorder %v26, %v644
  %vm741 = vcmp.eq.s32.totalorder %v24, %v647
  %vm742 = vcmp.eq.s32.totalorder %v25, %v647
  %vm743 = vcmp.eq.s32.totalorder %v26, %v647
  %vm744 = vcmp.eq.s32.totalorder %v24, %v650
  %vm745 = vcmp.eq.s32.totalorder %v25, %v650
  %vm746 = vcmp.eq.s32.totalorder %v26, %v650
  %vm747 = vcmp.eq.s32.totalorder %v24, %v653
  %vm748 = vcmp.eq.s32.totalorder %v25, %v653
  %vm749 = vcmp.eq.s32.totalorder %v26, %v653
  %vm750 = vcmp.eq.s32.totalorder %v24, %v656
  %vm751 = vcmp.eq.s32.totalorder %v25, %v656
  %vm752 = vcmp.eq.s32.totalorder %v26, %v656
  %vm753 = vcmp.eq.s32.totalorder %v24, %v659
  %vm754 = vcmp.eq.s32.totalorder %v25, %v659
  %vm755 = vcmp.eq.s32.totalorder %v26, %v659
  %vm756 = vcmp.eq.s32.totalorder %v24, %v662
  %vm757 = vcmp.eq.s32.totalorder %v25, %v662
  %vm758 = vcmp.eq.s32.totalorder %v26, %v662
  %vm759 = vcmp.eq.s32.totalorder %v24, %v665
  %vm760 = vcmp.eq.s32.totalorder %v25, %v665
  %vm761 = vcmp.eq.s32.totalorder %v26, %v665
  %vm762 = vcmp.eq.s32.totalorder %v24, %v668
  %vm763 = vcmp.eq.s32.totalorder %v25, %v668
  %vm764 = vcmp.eq.s32.totalorder %v26, %v668
  %vm765 = vcmp.eq.s32.totalorder %v24, %v671
  %vm766 = vcmp.eq.s32.totalorder %v25, %v671
  %vm767 = vcmp.eq.s32.totalorder %v26, %v671
  %vm768 = vcmp.eq.s32.totalorder %v24, %v674
  %vm769 = vcmp.eq.s32.totalorder %v25, %v674
  %vm770 = vcmp.eq.s32.totalorder %v26, %v674
  %vm771 = vcmp.eq.s32.totalorder %v24, %v677
  %vm772 = vcmp.eq.s32.totalorder %v25, %v677
  %vm773 = vcmp.eq.s32.totalorder %v26, %v677
  %vm774 = vcmp.eq.s32.totalorder %v24, %v680
  %vm775 = vcmp.eq.s32.totalorder %v25, %v680
  %vm776 = vcmp.eq.s32.totalorder %v26, %v680
  %vm777 = vcmp.eq.s32.totalorder %v24, %v683
  %vm778 = vcmp.eq.s32.totalorder %v25, %v683
  %vm779 = vcmp.eq.s32.totalorder %v26, %v683
  %vm780 = vcmp.eq.s32.totalorder %v24, %v686
  %vm781 = vcmp.eq.s32.totalorder %v25, %v686
  %vm782 = vcmp.eq.s32.totalorder %v26, %v686
  %vm783 = vcmp.eq.s32.totalorder %v24, %v689
  %vm784 = vcmp.eq.s32.totalorder %v25, %v689
  %vm785 = vcmp.eq.s32.totalorder %v26, %v689
  %vm786 = vcmp.eq.s32.totalorder %v24, %v692
  %vm787 = vcmp.eq.s32.totalorder %v25, %v692
  %vm788 = vcmp.eq.s32.totalorder %v26, %v692
  %vm789 = vcmp.eq.s32.totalorder %v24, %v695
  %vm790 = vcmp.eq.s32.totalorder %v25, %v695
  %vm791 = vcmp.eq.s32.totalorder %v26, %v695
  %vm792 = vcmp.eq.s32.totalorder %v24, %v698
  %vm793 = vcmp.eq.s32.totalorder %v25, %v698
  %vm794 = vcmp.eq.s32.totalorder %v26, %v698
  %vm795 = vmor %vm507, %vm699
  %vm796 = vmor %vm508, %vm700
  %vm797 = vmor %vm509, %vm701
  %vm798 = vmor %vm510, %vm702
  %vm799 = vmor %vm511, %vm703
  %vm800 = vmor %vm512, %vm704
  %vm801 = vmor %vm513, %vm705
  %vm802 = vmor %vm514, %vm706
  %vm803 = vmor %vm515, %vm707
  %vm804 = vmor %vm516, %vm708
  %vm805 = vmor %vm517, %vm709
  %vm806 = vmor %vm518, %vm710
  %vm807 = vmor %vm519, %vm711
  %vm808 = vmor %vm520, %vm712
  %vm809 = vmor %vm521, %vm713
  %vm810 = vmor %vm522, %vm714
  %vm811 = vmor %vm523, %vm715
  %vm812 = vmor %vm524, %vm716
  %vm813 = vmor %vm525, %vm717
  %vm814 = vmor %vm526, %vm718
  %vm815 = vmor %vm527, %vm719
  %vm816 = vmor %vm528, %vm720
  %vm817 = vmor %vm529, %vm721
  %vm818 = vmor %vm530, %vm722
  %vm819 = vmor %vm531, %vm723
  %vm820 = vmor %vm532, %vm724
  %vm821 = vmor %vm533, %vm725
  %vm822 = vmor %vm534, %vm726
  %vm823 = vmor %vm535, %vm727
  %vm824 = vmor %vm536, %vm728
  %vm825 = vmor %vm537, %vm729
  %vm826 = vmor %vm538, %vm730
  %vm827 = vmor %vm539, %vm731
  %vm828 = vmor %vm540, %vm732
  %vm829 = vmor %vm541, %vm733
  %vm830 = vmor %vm542, %vm734
  %vm831 = vmor %vm543, %vm735
  %vm832 = vmor %vm544, %vm736
  %vm833 = vmor %vm545, %vm737
  %vm834 = vmor %vm546, %vm738
  %vm835 = vmor %vm547, %vm739
  %vm836 = vmor %vm548, %vm740
  %vm837 = vmor %vm549, %vm741
  %vm838 = vmor %vm550, %vm742
  %vm839 = vmor %vm551, %vm743
  %vm840 = vmor %vm552, %vm744
  %vm841 = vmor %vm553, %vm745
  %vm842 = vmor %vm554, %vm746
  %vm843 = vmor %vm555, %vm747
  %vm844 = vmor %vm556, %vm748
  %vm845 = vmor %vm557, %vm749
  %vm846 = vmor %vm558, %vm750
  %vm847 = vmor %vm559, %vm751
  %vm848 = vmor %vm560, %vm752
  %vm849 = vmor %vm561, %vm753
  %vm850 = vmor %vm562, %vm754
  %vm851 = vmor %vm563, %vm755
  %vm852 = vmor %vm564, %vm756
  %vm853 = vmor %vm565, %vm757
  %vm854 = vmor %vm566, %vm758
  %vm855 = vmor %vm567, %vm759
  %vm856 = vmor %vm568, %vm760
  %vm857 = vmor %vm569, %vm761
  %vm858 = vmor %vm570, %vm762
  %vm859 = vmor %vm571, %vm763
  %vm860 = vmor %vm572, %vm764
  %vm861 = vmor %vm573, %vm765
  %vm862 = vmor %vm574, %vm766
  %vm863 = vmor %vm575, %vm767
  %vm864 = vmor %vm576, %vm768
  %vm865 = vmor %vm577, %vm769
  %vm866 = vmor %vm578, %vm770
  %vm867 = vmor %vm579, %vm771
  %vm868 = vmor %vm580, %vm772
  %vm869 = vmor %vm581, %vm773
  %vm870 = vmor %vm582, %vm774
  %vm871 = vmor %vm583, %vm775
  %vm872 = vmor %vm584, %vm776
  %vm873 = vmor %vm585, %vm777
  %vm874 = vmor %vm586, %vm778
  %vm875 = vmor %vm587, %vm779
  %vm876 = vmor %vm588, %vm780
  %vm877 = vmor %vm589, %vm781
  %vm878 = vmor %vm590, %vm782
  %vm879 = vmor %vm591, %vm783
  %vm880 = vmor %vm592, %vm784
  %vm881 = vmor %vm593, %vm785
  %vm882 = vmor %vm594, %vm786
  %vm883 = vmor %vm595, %vm787
  %vm884 = vmor %vm596, %vm788
  %vm885 = vmor %vm597, %vm789
  %vm886 = vmor %vm598, %vm790
  %vm887 = vmor %vm599, %vm791
  %vm888 = vmor %vm600, %vm792
  %vm889 = vmor %vm601, %vm793
  %vm890 = vmor %vm602, %vm794
  %v891 = vsel %vm795, 1, 0
  %v892 = vsel %vm796, 1, 0
  %v893 = vsel %vm797, 1, 0
  %v894 = vsel %vm798, 1, 0
  %v895 = vsel %vm799, 1, 0
  %v896 = vsel %vm800, 1, 0
  %v897 = vsel %vm801, 1, 0
  %v898 = vsel %vm802, 1, 0
  %v899 = vsel %vm803, 1, 0
  %v900 = vsel %vm804, 1, 0
  %v901 = vsel %vm805, 1, 0
  %v902 = vsel %vm806, 1, 0
  %v903 = vsel %vm807, 1, 0
  %v904 = vsel %vm808, 1, 0
  %v905 = vsel %vm809, 1, 0
  %v906 = vsel %vm810, 1, 0
  %v907 = vsel %vm811, 1, 0
  %v908 = vsel %vm812, 1, 0
  %v909 = vsel %vm813, 1, 0
  %v910 = vsel %vm814, 1, 0
  %v911 = vsel %vm815, 1, 0
  %v912 = vsel %vm816, 1, 0
  %v913 = vsel %vm817, 1, 0
  %v914 = vsel %vm818, 1, 0
  %v915 = vsel %vm819, 1, 0
  %v916 = vsel %vm820, 1, 0
  %v917 = vsel %vm821, 1, 0
  %v918 = vsel %vm822, 1, 0
  %v919 = vsel %vm823, 1, 0
  %v920 = vsel %vm824, 1, 0
  %v921 = vsel %vm825, 1, 0
  %v922 = vsel %vm826, 1, 0
  %v923 = vsel %vm827, 1, 0
  %v924 = vsel %vm828, 1, 0
  %v925 = vsel %vm829, 1, 0
  %v926 = vsel %vm830, 1, 0
  %v927 = vsel %vm831, 1, 0
  %v928 = vsel %vm832, 1, 0
  %v929 = vsel %vm833, 1, 0
  %v930 = vsel %vm834, 1, 0
  %v931 = vsel %vm835, 1, 0
  %v932 = vsel %vm836, 1, 0
  %v933 = vsel %vm837, 1, 0
  %v934 = vsel %vm838, 1, 0
  %v935 = vsel %vm839, 1, 0
  %v936 = vsel %vm840, 1, 0
  %v937 = vsel %vm841, 1, 0
  %v938 = vsel %vm842, 1, 0
  %v939 = vsel %vm843, 1, 0
  %v940 = vsel %vm844, 1, 0
  %v941 = vsel %vm845, 1, 0
  %v942 = vsel %vm846, 1, 0
  %v943 = vsel %vm847, 1, 0
  %v944 = vsel %vm848, 1, 0
  %v945 = vsel %vm849, 1, 0
  %v946 = vsel %vm850, 1, 0
  %v947 = vsel %vm851, 1, 0
  %v948 = vsel %vm852, 1, 0
  %v949 = vsel %vm853, 1, 0
  %v950 = vsel %vm854, 1, 0
  %v951 = vsel %vm855, 1, 0
  %v952 = vsel %vm856, 1, 0
  %v953 = vsel %vm857, 1, 0
  %v954 = vsel %vm858, 1, 0
  %v955 = vsel %vm859, 1, 0
  %v956 = vsel %vm860, 1, 0
  %v957 = vsel %vm861, 1, 0
  %v958 = vsel %vm862, 1, 0
  %v959 = vsel %vm863, 1, 0
  %v960 = vsel %vm864, 1, 0
  %v961 = vsel %vm865, 1, 0
  %v962 = vsel %vm866, 1, 0
  %v963 = vsel %vm867, 1, 0
  %v964 = vsel %vm868, 1, 0
  %v965 = vsel %vm869, 1, 0
  %v966 = vsel %vm870, 1, 0
  %v967 = vsel %vm871, 1, 0
  %v968 = vsel %vm872, 1, 0
  %v969 = vsel %vm873, 1, 0
  %v970 = vsel %vm874, 1, 0
  %v971 = vsel %vm875, 1, 0
  %v972 = vsel %vm876, 1, 0
  %v973 = vsel %vm877, 1, 0
  %v974 = vsel %vm878, 1, 0
  %v975 = vsel %vm879, 1, 0
  %v976 = vsel %vm880, 1, 0
  %v977 = vsel %vm881, 1, 0
  %v978 = vsel %vm882, 1, 0
  %v979 = vsel %vm883, 1, 0
  %v980 = vsel %vm884, 1, 0
  %v981 = vsel %vm885, 1, 0
  %v982 = vsel %vm886, 1, 0
  %v983 = vsel %vm887, 1, 0
  %v984 = vsel %vm888, 1, 0
  %v985 = vsel %vm889, 1, 0
  %v986 = vsel %vm890, 1, 0
  %v987 = vcvt.s32.f32 %v891
  %v988 = vcvt.s32.f32 %v892
  %v989 = vcvt.s32.f32 %v893
  %v990 = vcvt.s32.f32 %v894
  %v991 = vcvt.s32.f32 %v895
  %v992 = vcvt.s32.f32 %v896
  %v993 = vcvt.s32.f32 %v897
  %v994 = vcvt.s32.f32 %v898
  %v995 = vcvt.s32.f32 %v899
  %v996 = vcvt.s32.f32 %v900
  %v997 = vcvt.s32.f32 %v901
  %v998 = vcvt.s32.f32 %v902
  %v999 = vcvt.s32.f32 %v903
  %v1000 = vcvt.s32.f32 %v904
  %v1001 = vcvt.s32.f32 %v905
  %v1002 = vcvt.s32.f32 %v906
  %v1003 = vcvt.s32.f32 %v907
  %v1004 = vcvt.s32.f32 %v908
  %v1005 = vcvt.s32.f32 %v909
  %v1006 = vcvt.s32.f32 %v910
  %v1007 = vcvt.s32.f32 %v911
  %v1008 = vcvt.s32.f32 %v912
  %v1009 = vcvt.s32.f32 %v913
  %v1010 = vcvt.s32.f32 %v914
  %v1011 = vcvt.s32.f32 %v915
  %v1012 = vcvt.s32.f32 %v916
  %v1013 = vcvt.s32.f32 %v917
  %v1014 = vcvt.s32.f32 %v918
  %v1015 = vcvt.s32.f32 %v919
  %v1016 = vcvt.s32.f32 %v920
  %v1017 = vcvt.s32.f32 %v921
  %v1018 = vcvt.s32.f32 %v922
  %v1019 = vcvt.s32.f32 %v923
  %v1020 = vcvt.s32.f32 %v924
  %v1021 = vcvt.s32.f32 %v925
  %v1022 = vcvt.s32.f32 %v926
  %v1023 = vcvt.s32.f32 %v927
  %v1024 = vcvt.s32.f32 %v928
  %v1025 = vcvt.s32.f32 %v929
  %v1026 = vcvt.s32.f32 %v930
  %v1027 = vcvt.s32.f32 %v931
  %v1028 = vcvt.s32.f32 %v932
  %v1029 = vcvt.s32.f32 %v933
  %v1030 = vcvt.s32.f32 %v934
  %v1031 = vcvt.s32.f32 %v935
  %v1032 = vcvt.s32.f32 %v936
  %v1033 = vcvt.s32.f32 %v937
  %v1034 = vcvt.s32.f32 %v938
  %v1035 = vcvt.s32.f32 %v939
  %v1036 = vcvt.s32.f32 %v940
  %v1037 = vcvt.s32.f32 %v941
  %v1038 = vcvt.s32.f32 %v942
  %v1039 = vcvt.s32.f32 %v943
  %v1040 = vcvt.s32.f32 %v944
  %v1041 = vcvt.s32.f32 %v945
  %v1042 = vcvt.s32.f32 %v946
  %v1043 = vcvt.s32.f32 %v947
  %v1044 = vcvt.s32.f32 %v948
  %v1045 = vcvt.s32.f32 %v949
  %v1046 = vcvt.s32.f32 %v950
  %v1047 = vcvt.s32.f32 %v951
  %v1048 = vcvt.s32.f32 %v952
  %v1049 = vcvt.s32.f32 %v953
  %v1050 = vcvt.s32.f32 %v954
  %v1051 = vcvt.s32.f32 %v955
  %v1052 = vcvt.s32.f32 %v956
  %v1053 = vcvt.s32.f32 %v957
  %v1054 = vcvt.s32.f32 %v958
  %v1055 = vcvt.s32.f32 %v959
  %v1056 = vcvt.s32.f32 %v960
  %v1057 = vcvt.s32.f32 %v961
  %v1058 = vcvt.s32.f32 %v962
  %v1059 = vcvt.s32.f32 %v963
  %v1060 = vcvt.s32.f32 %v964
  %v1061 = vcvt.s32.f32 %v965
  %v1062 = vcvt.s32.f32 %v966
  %v1063 = vcvt.s32.f32 %v967
  %v1064 = vcvt.s32.f32 %v968
  %v1065 = vcvt.s32.f32 %v969
  %v1066 = vcvt.s32.f32 %v970
  %v1067 = vcvt.s32.f32 %v971
  %v1068 = vcvt.s32.f32 %v972
  %v1069 = vcvt.s32.f32 %v973
  %v1070 = vcvt.s32.f32 %v974
  %v1071 = vcvt.s32.f32 %v975
  %v1072 = vcvt.s32.f32 %v976
  %v1073 = vcvt.s32.f32 %v977
  %v1074 = vcvt.s32.f32 %v978
  %v1075 = vcvt.s32.f32 %v979
  %v1076 = vcvt.s32.f32 %v980
  %v1077 = vcvt.s32.f32 %v981
  %v1078 = vcvt.s32.f32 %v982
  %v1079 = vcvt.s32.f32 %v983
  %v1080 = vcvt.s32.f32 %v984
  %v1081 = vcvt.s32.f32 %v985
  %v1082 = vcvt.s32.f32 %v986
  %v1083 = vld [vmem:[%s3] sm:$0xff]
  %v1084 = vld [vmem:[%s3 + $0x8] sm:$0xff]
  %v1085 = vld [vmem:[%s3 + $0x10] sm:$0xff]
  %v1086 = vld [vmem:[%s3 + $0x18] sm:$0xff]
  %v1087 = vld [vmem:[%s3 + $0x20] sm:$0xff]
  %v1088 = vld [vmem:[%s3 + $0x28] sm:$0xff]
  %v1089 = vld [vmem:[%s3 + $0x30] sm:$0xff]
  %v1090 = vld [vmem:[%s3 + $0x38] sm:$0xff]
  %v1091 = vld [vmem:[%s3 + $0x40] sm:$0xff]
  %v1092 = vld [vmem:[%s3 + $0x48] sm:$0xff]
  %v1093 = vld [vmem:[%s3 + $0x50] sm:$0xff]
  %v1094 = vld [vmem:[%s3 + $0x58] sm:$0xff]
  %v1095 = vld [vmem:[%s3 + $0x60] sm:$0xff]
  %v1096 = vld [vmem:[%s3 + $0x68] sm:$0xff]
  %v1097 = vld [vmem:[%s3 + $0x70] sm:$0xff]
  %v1098 = vld [vmem:[%s3 + $0x78] sm:$0xff]
  %v1099 = vld [vmem:[%s3 + $0x80] sm:$0xff]
  %v1100 = vld [vmem:[%s3 + $0x88] sm:$0xff]
  %v1101 = vld [vmem:[%s3 + $0x90] sm:$0xff]
  %v1102 = vld [vmem:[%s3 + $0x98] sm:$0xff]
  %v1103 = vld [vmem:[%s3 + $0xa0] sm:$0xff]
  %v1104 = vld [vmem:[%s3 + $0xa8] sm:$0xff]
  %v1105 = vld [vmem:[%s3 + $0xb0] sm:$0xff]
  %v1106 = vld [vmem:[%s3 + $0xb8] sm:$0xff]
  %v1107 = vld [vmem:[%s3 + $0xc0] sm:$0xff]
  %v1108 = vld [vmem:[%s3 + $0xc8] sm:$0xff]
  %v1109 = vld [vmem:[%s3 + $0xd0] sm:$0xff]
  %v1110 = vld [vmem:[%s3 + $0xd8] sm:$0xff]
  %v1111 = vld [vmem:[%s3 + $0xe0] sm:$0xff]
  %v1112 = vld [vmem:[%s3 + $0xe8] sm:$0xff]
  %v1113 = vld [vmem:[%s3 + $0xf0] sm:$0xff]
  %v1114 = vld [vmem:[%s3 + $0xf8] sm:$0xff]
  %v1115 = vld [vmem:[%s3 + $0x100] sm:$0xff]
  %v1116 = vld [vmem:[%s3 + $0x108] sm:$0xff]
  %v1117 = vld [vmem:[%s3 + $0x110] sm:$0xff]
  %v1118 = vld [vmem:[%s3 + $0x118] sm:$0xff]
  %v1119 = vld [vmem:[%s3 + $0x120] sm:$0xff]
  %v1120 = vld [vmem:[%s3 + $0x128] sm:$0xff]
  %v1121 = vld [vmem:[%s3 + $0x130] sm:$0xff]
  %v1122 = vld [vmem:[%s3 + $0x138] sm:$0xff]
  %v1123 = vld [vmem:[%s3 + $0x140] sm:$0xff]
  %v1124 = vld [vmem:[%s3 + $0x148] sm:$0xff]
  %v1125 = vld [vmem:[%s3 + $0x150] sm:$0xff]
  %v1126 = vld [vmem:[%s3 + $0x158] sm:$0xff]
  %v1127 = vld [vmem:[%s3 + $0x160] sm:$0xff]
  %v1128 = vld [vmem:[%s3 + $0x168] sm:$0xff]
  %v1129 = vld [vmem:[%s3 + $0x170] sm:$0xff]
  %v1130 = vld [vmem:[%s3 + $0x178] sm:$0xff]
  %1131 = vmatpush.msra.mxu0 %v1098
  %1132 = vmatpush.msra.mxu0 %v1097
  %1133 = vmatpush.msra.mxu0 %v1096
  %1134 = vmatpush.msra.mxu0 %v1095
  %1135 = vmatpush.msra.mxu0 %v1094
  %1136 = vmatpush.msra.mxu0 %v1093
  %1137 = vmatpush.msra.mxu0 %v1092
  %1138 = vmatpush.msra.mxu0 %v1091
  %1139 = vmatpush.msra.mxu0 %v1090
  %1140 = vmatpush.msra.mxu0 %v1089
  %1141 = vmatpush.msra.mxu0 %v1088
  %1142 = vmatpush.msra.mxu0 %v1087
  %1143 = vmatpush.msra.mxu0 %v1086
  %1144 = vmatpush.msra.mxu0 %v1085
  %1145 = vmatpush.msra.mxu0 %v1084
  %1146 = vmatpush.msra.mxu0 %v1083
  %1147 = vmatmul.f32.gmra.mxu0 %v987
  %v1148 = vpop.f32.mrf.mxu0
  %v1149 = vadd.f32 0.0, %v1148
  %1150 = vmatmul.f32.gmra.mxu0 %v990
  %v1151 = vpop.f32.mrf.mxu0
  %v1152 = vadd.f32 0.0, %v1151
  %1153 = vmatmul.f32.gmra.mxu0 %v993
  %v1154 = vpop.f32.mrf.mxu0
  %v1155 = vadd.f32 0.0, %v1154
  %1156 = vmatmul.f32.gmra.mxu0 %v996
  %v1157 = vpop.f32.mrf.mxu0
  %v1158 = vadd.f32 0.0, %v1157
  %1159 = vmatmul.f32.gmra.mxu0 %v999
  %v1160 = vpop.f32.mrf.mxu0
  %v1161 = vadd.f32 0.0, %v1160
  %1162 = vmatmul.f32.gmra.mxu0 %v1002
  %v1163 = vpop.f32.mrf.mxu0
  %v1164 = vadd.f32 0.0, %v1163
  %1165 = vmatmul.f32.gmra.mxu0 %v1005
  %v1166 = vpop.f32.mrf.mxu0
  %v1167 = vadd.f32 0.0, %v1166
  %1168 = vmatmul.f32.gmra.mxu0 %v1008
  %v1169 = vpop.f32.mrf.mxu0
  %v1170 = vadd.f32 0.0, %v1169
  %1171 = vmatmul.f32.gmra.mxu0 %v1011
  %v1172 = vpop.f32.mrf.mxu0
  %v1173 = vadd.f32 0.0, %v1172
  %1174 = vmatmul.f32.gmra.mxu0 %v1014
  %v1175 = vpop.f32.mrf.mxu0
  %v1176 = vadd.f32 0.0, %v1175
  %1177 = vmatmul.f32.gmra.mxu0 %v1017
  %v1178 = vpop.f32.mrf.mxu0
  %v1179 = vadd.f32 0.0, %v1178
  %1180 = vmatmul.f32.gmra.mxu0 %v1020
  %v1181 = vpop.f32.mrf.mxu0
  %v1182 = vadd.f32 0.0, %v1181
  %1183 = vmatmul.f32.gmra.mxu0 %v1023
  %v1184 = vpop.f32.mrf.mxu0
  %v1185 = vadd.f32 0.0, %v1184
  %1186 = vmatmul.f32.gmra.mxu0 %v1026
  %v1187 = vpop.f32.mrf.mxu0
  %v1188 = vadd.f32 0.0, %v1187
  %1189 = vmatmul.f32.gmra.mxu0 %v1029
  %v1190 = vpop.f32.mrf.mxu0
  %v1191 = vadd.f32 0.0, %v1190
  %1192 = vmatmul.f32.gmra.mxu0 %v1032
  %v1193 = vpop.f32.mrf.mxu0
  %v1194 = vadd.f32 0.0, %v1193
  %1195 = vmatmul.f32.gmra.mxu0 %v1035
  %v1196 = vpop.f32.mrf.mxu0
  %v1197 = vadd.f32 0.0, %v1196
  %1198 = vmatmul.f32.gmra.mxu0 %v1038
  %v1199 = vpop.f32.mrf.mxu0
  %v1200 = vadd.f32 0.0, %v1199
  %1201 = vmatmul.f32.gmra.mxu0 %v1041
  %v1202 = vpop.f32.mrf.mxu0
  %v1203 = vadd.f32 0.0, %v1202
  %1204 = vmatmul.f32.gmra.mxu0 %v1044
  %v1205 = vpop.f32.mrf.mxu0
  %v1206 = vadd.f32 0.0, %v1205
  %1207 = vmatmul.f32.gmra.mxu0 %v1047
  %v1208 = vpop.f32.mrf.mxu0
  %v1209 = vadd.f32 0.0, %v1208
  %1210 = vmatmul.f32.gmra.mxu0 %v1050
  %v1211 = vpop.f32.mrf.mxu0
  %v1212 = vadd.f32 0.0, %v1211
  %1213 = vmatmul.f32.gmra.mxu0 %v1053
  %v1214 = vpop.f32.mrf.mxu0
  %v1215 = vadd.f32 0.0, %v1214
  %1216 = vmatmul.f32.gmra.mxu0 %v1056
  %v1217 = vpop.f32.mrf.mxu0
  %v1218 = vadd.f32 0.0, %v1217
  %1219 = vmatmul.f32.gmra.mxu0 %v1059
  %v1220 = vpop.f32.mrf.mxu0
  %v1221 = vadd.f32 0.0, %v1220
  %1222 = vmatmul.f32.gmra.mxu0 %v1062
  %v1223 = vpop.f32.mrf.mxu0
  %v1224 = vadd.f32 0.0, %v1223
  %1225 = vmatmul.f32.gmra.mxu0 %v1065
  %v1226 = vpop.f32.mrf.mxu0
  %v1227 = vadd.f32 0.0, %v1226
  %1228 = vmatmul.f32.gmra.mxu0 %v1068
  %v1229 = vpop.f32.mrf.mxu0
  %v1230 = vadd.f32 0.0, %v1229
  %1231 = vmatmul.f32.gmra.mxu0 %v1071
  %v1232 = vpop.f32.mrf.mxu0
  %v1233 = vadd.f32 0.0, %v1232
  %1234 = vmatmul.f32.gmra.mxu0 %v1074
  %v1235 = vpop.f32.mrf.mxu0
  %v1236 = vadd.f32 0.0, %v1235
  %1237 = vmatmul.f32.gmra.mxu0 %v1077
  %v1238 = vpop.f32.mrf.mxu0
  %v1239 = vadd.f32 0.0, %v1238
  %1240 = vmatmul.f32.gmra.mxu0 %v1080
  %v1241 = vpop.f32.mrf.mxu0
  %v1242 = vadd.f32 0.0, %v1241
  %1243 = vdwg.mxu0
  %1244 = vmatpush.msra.mxu0 %v1114
  %1245 = vmatpush.msra.mxu0 %v1113
  %1246 = vmatpush.msra.mxu0 %v1112
  %1247 = vmatpush.msra.mxu0 %v1111
  %1248 = vmatpush.msra.mxu0 %v1110
  %1249 = vmatpush.msra.mxu0 %v1109
  %1250 = vmatpush.msra.mxu0 %v1108
  %1251 = vmatpush.msra.mxu0 %v1107
  %1252 = vmatpush.msra.mxu0 %v1106
  %1253 = vmatpush.msra.mxu0 %v1105
  %1254 = vmatpush.msra.mxu0 %v1104
  %1255 = vmatpush.msra.mxu0 %v1103
  %1256 = vmatpush.msra.mxu0 %v1102
  %1257 = vmatpush.msra.mxu0 %v1101
  %1258 = vmatpush.msra.mxu0 %v1100
  %1259 = vmatpush.msra.mxu0 %v1099
  %1260 = vmatmul.f32.gmra.mxu0 %v988
  %v1261 = vpop.f32.mrf.mxu0
  %v1262 = vadd.f32 %v1149, %v1261
  %1263 = vmatmul.f32.gmra.mxu0 %v991
  %v1264 = vpop.f32.mrf.mxu0
  %v1265 = vadd.f32 %v1152, %v1264
  %1266 = vmatmul.f32.gmra.mxu0 %v994
  %v1267 = vpop.f32.mrf.mxu0
  %v1268 = vadd.f32 %v1155, %v1267
  %1269 = vmatmul.f32.gmra.mxu0 %v997
  %v1270 = vpop.f32.mrf.mxu0
  %v1271 = vadd.f32 %v1158, %v1270
  %1272 = vmatmul.f32.gmra.mxu0 %v1000
  %v1273 = vpop.f32.mrf.mxu0
  %v1274 = vadd.f32 %v1161, %v1273
  %1275 = vmatmul.f32.gmra.mxu0 %v1003
  %v1276 = vpop.f32.mrf.mxu0
  %v1277 = vadd.f32 %v1164, %v1276
  %1278 = vmatmul.f32.gmra.mxu0 %v1006
  %v1279 = vpop.f32.mrf.mxu0
  %v1280 = vadd.f32 %v1167, %v1279
  %1281 = vmatmul.f32.gmra.mxu0 %v1009
  %v1282 = vpop.f32.mrf.mxu0
  %v1283 = vadd.f32 %v1170, %v1282
  %1284 = vmatmul.f32.gmra.mxu0 %v1012
  %v1285 = vpop.f32.mrf.mxu0
  %v1286 = vadd.f32 %v1173, %v1285
  %1287 = vmatmul.f32.gmra.mxu0 %v1015
  %v1288 = vpop.f32.mrf.mxu0
  %v1289 = vadd.f32 %v1176, %v1288
  %1290 = vmatmul.f32.gmra.mxu0 %v1018
  %v1291 = vpop.f32.mrf.mxu0
  %v1292 = vadd.f32 %v1179, %v1291
  %1293 = vmatmul.f32.gmra.mxu0 %v1021
  %v1294 = vpop.f32.mrf.mxu0
  %v1295 = vadd.f32 %v1182, %v1294
  %1296 = vmatmul.f32.gmra.mxu0 %v1024
  %v1297 = vpop.f32.mrf.mxu0
  %v1298 = vadd.f32 %v1185, %v1297
  %1299 = vmatmul.f32.gmra.mxu0 %v1027
  %v1300 = vpop.f32.mrf.mxu0
  %v1301 = vadd.f32 %v1188, %v1300
  %1302 = vmatmul.f32.gmra.mxu0 %v1030
  %v1303 = vpop.f32.mrf.mxu0
  %v1304 = vadd.f32 %v1191, %v1303
  %1305 = vmatmul.f32.gmra.mxu0 %v1033
  %v1306 = vpop.f32.mrf.mxu0
  %v1307 = vadd.f32 %v1194, %v1306
  %1308 = vmatmul.f32.gmra.mxu0 %v1036
  %v1309 = vpop.f32.mrf.mxu0
  %v1310 = vadd.f32 %v1197, %v1309
  %1311 = vmatmul.f32.gmra.mxu0 %v1039
  %v1312 = vpop.f32.mrf.mxu0
  %v1313 = vadd.f32 %v1200, %v1312
  %1314 = vmatmul.f32.gmra.mxu0 %v1042
  %v1315 = vpop.f32.mrf.mxu0
  %v1316 = vadd.f32 %v1203, %v1315
  %1317 = vmatmul.f32.gmra.mxu0 %v1045
  %v1318 = vpop.f32.mrf.mxu0
  %v1319 = vadd.f32 %v1206, %v1318
  %1320 = vmatmul.f32.gmra.mxu0 %v1048
  %v1321 = vpop.f32.mrf.mxu0
  %v1322 = vadd.f32 %v1209, %v1321
  %1323 = vmatmul.f32.gmra.mxu0 %v1051
  %v1324 = vpop.f32.mrf.mxu0
  %v1325 = vadd.f32 %v1212, %v1324
  %1326 = vmatmul.f32.gmra.mxu0 %v1054
  %v1327 = vpop.f32.mrf.mxu0
  %v1328 = vadd.f32 %v1215, %v1327
  %1329 = vmatmul.f32.gmra.mxu0 %v1057
  %v1330 = vpop.f32.mrf.mxu0
  %v1331 = vadd.f32 %v1218, %v1330
  %1332 = vmatmul.f32.gmra.mxu0 %v1060
  %v1333 = vpop.f32.mrf.mxu0
  %v1334 = vadd.f32 %v1221, %v1333
  %1335 = vmatmul.f32.gmra.mxu0 %v1063
  %v1336 = vpop.f32.mrf.mxu0
  %v1337 = vadd.f32 %v1224, %v1336
  %1338 = vmatmul.f32.gmra.mxu0 %v1066
  %v1339 = vpop.f32.mrf.mxu0
  %v1340 = vadd.f32 %v1227, %v1339
  %1341 = vmatmul.f32.gmra.mxu0 %v1069
  %v1342 = vpop.f32.mrf.mxu0
  %v1343 = vadd.f32 %v1230, %v1342
  %1344 = vmatmul.f32.gmra.mxu0 %v1072
  %v1345 = vpop.f32.mrf.mxu0
  %v1346 = vadd.f32 %v1233, %v1345
  %1347 = vmatmul.f32.gmra.mxu0 %v1075
  %v1348 = vpop.f32.mrf.mxu0
  %v1349 = vadd.f32 %v1236, %v1348
  %1350 = vmatmul.f32.gmra.mxu0 %v1078
  %v1351 = vpop.f32.mrf.mxu0
  %v1352 = vadd.f32 %v1239, %v1351
  %1353 = vmatmul.f32.gmra.mxu0 %v1081
  %v1354 = vpop.f32.mrf.mxu0
  %v1355 = vadd.f32 %v1242, %v1354
  %1356 = vdwg.mxu0
  %1357 = vmatpush.msra.mxu0 %v1130
  %1358 = vmatpush.msra.mxu0 %v1129
  %1359 = vmatpush.msra.mxu0 %v1128
  %1360 = vmatpush.msra.mxu0 %v1127
  %1361 = vmatpush.msra.mxu0 %v1126
  %1362 = vmatpush.msra.mxu0 %v1125
  %1363 = vmatpush.msra.mxu0 %v1124
  %1364 = vmatpush.msra.mxu0 %v1123
  %1365 = vmatpush.msra.mxu0 %v1122
  %1366 = vmatpush.msra.mxu0 %v1121
  %1367 = vmatpush.msra.mxu0 %v1120
  %1368 = vmatpush.msra.mxu0 %v1119
  %1369 = vmatpush.msra.mxu0 %v1118
  %1370 = vmatpush.msra.mxu0 %v1117
  %1371 = vmatpush.msra.mxu0 %v1116
  %1372 = vmatpush.msra.mxu0 %v1115
  %1373 = vmatmul.f32.gmra.mxu0 %v989
  %v1374 = vpop.f32.mrf.mxu0
  %v1375 = vadd.f32 %v1262, %v1374
  %1376 = vmatmul.f32.gmra.mxu0 %v992
  %v1377 = vpop.f32.mrf.mxu0
  %v1378 = vadd.f32 %v1265, %v1377
  %1379 = vmatmul.f32.gmra.mxu0 %v995
  %v1380 = vpop.f32.mrf.mxu0
  %v1381 = vadd.f32 %v1268, %v1380
  %1382 = vmatmul.f32.gmra.mxu0 %v998
  %v1383 = vpop.f32.mrf.mxu0
  %v1384 = vadd.f32 %v1271, %v1383
  %1385 = vmatmul.f32.gmra.mxu0 %v1001
  %v1386 = vpop.f32.mrf.mxu0
  %v1387 = vadd.f32 %v1274, %v1386
  %1388 = vmatmul.f32.gmra.mxu0 %v1004
  %v1389 = vpop.f32.mrf.mxu0
  %v1390 = vadd.f32 %v1277, %v1389
  %1391 = vmatmul.f32.gmra.mxu0 %v1007
  %v1392 = vpop.f32.mrf.mxu0
  %v1393 = vadd.f32 %v1280, %v1392
  %1394 = vmatmul.f32.gmra.mxu0 %v1010
  %v1395 = vpop.f32.mrf.mxu0
  %v1396 = vadd.f32 %v1283, %v1395
  %1397 = vmatmul.f32.gmra.mxu0 %v1013
  %v1398 = vpop.f32.mrf.mxu0
  %v1399 = vadd.f32 %v1286, %v1398
  %1400 = vmatmul.f32.gmra.mxu0 %v1016
  %v1401 = vpop.f32.mrf.mxu0
  %v1402 = vadd.f32 %v1289, %v1401
  %1403 = vmatmul.f32.gmra.mxu0 %v1019
  %v1404 = vpop.f32.mrf.mxu0
  %v1405 = vadd.f32 %v1292, %v1404
  %1406 = vmatmul.f32.gmra.mxu0 %v1022
  %v1407 = vpop.f32.mrf.mxu0
  %v1408 = vadd.f32 %v1295, %v1407
  %1409 = vmatmul.f32.gmra.mxu0 %v1025
  %v1410 = vpop.f32.mrf.mxu0
  %v1411 = vadd.f32 %v1298, %v1410
  %1412 = vmatmul.f32.gmra.mxu0 %v1028
  %v1413 = vpop.f32.mrf.mxu0
  %v1414 = vadd.f32 %v1301, %v1413
  %1415 = vmatmul.f32.gmra.mxu0 %v1031
  %v1416 = vpop.f32.mrf.mxu0
  %v1417 = vadd.f32 %v1304, %v1416
  %1418 = vmatmul.f32.gmra.mxu0 %v1034
  %v1419 = vpop.f32.mrf.mxu0
  %v1420 = vadd.f32 %v1307, %v1419
  %1421 = vmatmul.f32.gmra.mxu0 %v1037
  %v1422 = vpop.f32.mrf.mxu0
  %v1423 = vadd.f32 %v1310, %v1422
  %1424 = vmatmul.f32.gmra.mxu0 %v1040
  %v1425 = vpop.f32.mrf.mxu0
  %v1426 = vadd.f32 %v1313, %v1425
  %1427 = vmatmul.f32.gmra.mxu0 %v1043
  %v1428 = vpop.f32.mrf.mxu0
  %v1429 = vadd.f32 %v1316, %v1428
  %1430 = vmatmul.f32.gmra.mxu0 %v1046
  %v1431 = vpop.f32.mrf.mxu0
  %v1432 = vadd.f32 %v1319, %v1431
  %1433 = vmatmul.f32.gmra.mxu0 %v1049
  %v1434 = vpop.f32.mrf.mxu0
  %v1435 = vadd.f32 %v1322, %v1434
  %1436 = vmatmul.f32.gmra.mxu0 %v1052
  %v1437 = vpop.f32.mrf.mxu0
  %v1438 = vadd.f32 %v1325, %v1437
  %1439 = vmatmul.f32.gmra.mxu0 %v1055
  %v1440 = vpop.f32.mrf.mxu0
  %v1441 = vadd.f32 %v1328, %v1440
  %1442 = vmatmul.f32.gmra.mxu0 %v1058
  %v1443 = vpop.f32.mrf.mxu0
  %v1444 = vadd.f32 %v1331, %v1443
  %1445 = vmatmul.f32.gmra.mxu0 %v1061
  %v1446 = vpop.f32.mrf.mxu0
  %v1447 = vadd.f32 %v1334, %v1446
  %1448 = vmatmul.f32.gmra.mxu0 %v1064
  %v1449 = vpop.f32.mrf.mxu0
  %v1450 = vadd.f32 %v1337, %v1449
  %1451 = vmatmul.f32.gmra.mxu0 %v1067
  %v1452 = vpop.f32.mrf.mxu0
  %v1453 = vadd.f32 %v1340, %v1452
  %1454 = vmatmul.f32.gmra.mxu0 %v1070
  %v1455 = vpop.f32.mrf.mxu0
  %v1456 = vadd.f32 %v1343, %v1455
  %1457 = vmatmul.f32.gmra.mxu0 %v1073
  %v1458 = vpop.f32.mrf.mxu0
  %v1459 = vadd.f32 %v1346, %v1458
  %1460 = vmatmul.f32.gmra.mxu0 %v1076
  %v1461 = vpop.f32.mrf.mxu0
  %v1462 = vadd.f32 %v1349, %v1461
  %1463 = vmatmul.f32.gmra.mxu0 %v1079
  %v1464 = vpop.f32.mrf.mxu0
  %v1465 = vadd.f32 %v1352, %v1464
  %1466 = vmatmul.f32.gmra.mxu0 %v1082
  %v1467 = vpop.f32.mrf.mxu0
  %v1468 = vadd.f32 %v1355, %v1467
  %1469 = vdwg.mxu0
  %1470 = vadd.xlane.f32.xlu0 %v1375
  %v1471 = vpop.xlane.xlu0 %1470
  %1472 = vadd.xlane.f32.xlu0 %v1378
  %v1473 = vpop.xlane.xlu0 %1472
  %1474 = vadd.xlane.f32.xlu0 %v1381
  %v1475 = vpop.xlane.xlu0 %1474
  %1476 = vadd.xlane.f32.xlu0 %v1384
  %v1477 = vpop.xlane.xlu0 %1476
  %1478 = vadd.xlane.f32.xlu0 %v1387
  %v1479 = vpop.xlane.xlu0 %1478
  %1480 = vadd.xlane.f32.xlu0 %v1390
  %v1481 = vpop.xlane.xlu0 %1480
  %1482 = vadd.xlane.f32.xlu0 %v1393
  %v1483 = vpop.xlane.xlu0 %1482
  %1484 = vadd.xlane.f32.xlu0 %v1396
  %v1485 = vpop.xlane.xlu0 %1484
  %1486 = vadd.xlane.f32.xlu0 %v1399
  %v1487 = vpop.xlane.xlu0 %1486
  %1488 = vadd.xlane.f32.xlu0 %v1402
  %v1489 = vpop.xlane.xlu0 %1488
  %1490 = vadd.xlane.f32.xlu0 %v1405
  %v1491 = vpop.xlane.xlu0 %1490
  %1492 = vadd.xlane.f32.xlu0 %v1408
  %v1493 = vpop.xlane.xlu0 %1492
  %1494 = vadd.xlane.f32.xlu0 %v1411
  %v1495 = vpop.xlane.xlu0 %1494
  %1496 = vadd.xlane.f32.xlu0 %v1414
  %v1497 = vpop.xlane.xlu0 %1496
  %1498 = vadd.xlane.f32.xlu0 %v1417
  %v1499 = vpop.xlane.xlu0 %1498
  %1500 = vadd.xlane.f32.xlu0 %v1420
  %v1501 = vpop.xlane.xlu0 %1500
  %1502 = vadd.xlane.f32.xlu0 %v1423
  %v1503 = vpop.xlane.xlu0 %1502
  %1504 = vadd.xlane.f32.xlu0 %v1426
  %v1505 = vpop.xlane.xlu0 %1504
  %1506 = vadd.xlane.f32.xlu0 %v1429
  %v1507 = vpop.xlane.xlu0 %1506
  %1508 = vadd.xlane.f32.xlu0 %v1432
  %v1509 = vpop.xlane.xlu0 %1508
  %1510 = vadd.xlane.f32.xlu0 %v1435
  %v1511 = vpop.xlane.xlu0 %1510
  %1512 = vadd.xlane.f32.xlu0 %v1438
  %v1513 = vpop.xlane.xlu0 %1512
  %1514 = vadd.xlane.f32.xlu0 %v1441
  %v1515 = vpop.xlane.xlu0 %1514
  %1516 = vadd.xlane.f32.xlu0 %v1444
  %v1517 = vpop.xlane.xlu0 %1516
  %1518 = vadd.xlane.f32.xlu0 %v1447
  %v1519 = vpop.xlane.xlu0 %1518
  %1520 = vadd.xlane.f32.xlu0 %v1450
  %v1521 = vpop.xlane.xlu0 %1520
  %1522 = vadd.xlane.f32.xlu0 %v1453
  %v1523 = vpop.xlane.xlu0 %1522
  %1524 = vadd.xlane.f32.xlu0 %v1456
  %v1525 = vpop.xlane.xlu0 %1524
  %1526 = vadd.xlane.f32.xlu0 %v1459
  %v1527 = vpop.xlane.xlu0 %1526
  %1528 = vadd.xlane.f32.xlu0 %v1462
  %v1529 = vpop.xlane.xlu0 %1528
  %1530 = vadd.xlane.f32.xlu0 %v1465
  %v1531 = vpop.xlane.xlu0 %1530
  %1532 = vadd.xlane.f32.xlu0 %v1468
  %v1533 = vpop.xlane.xlu0 %1532
  %v1534 = vrcp.pop 128.0
  %v1535 = vmul.f32 128.0, %v1534
  %v1536 = vsub.f32 1.0, %v1535
  %v1537 = vmul.f32 %v1534, %v1536
  %v1538 = vadd.f32 %v1534, %v1537
  %vm1539 = vweird.f32 %v1534
  %v1540 = vsel %vm1539, %v1534, %v1538
  %v1541 = vmul.f32 %v1471, %v1540
  %v1542 = vmul.f32 %v1473, %v1540
  %v1543 = vmul.f32 %v1475, %v1540
  %v1544 = vmul.f32 %v1477, %v1540
  %v1545 = vmul.f32 %v1479, %v1540
  %v1546 = vmul.f32 %v1481, %v1540
  %v1547 = vmul.f32 %v1483, %v1540
  %v1548 = vmul.f32 %v1485, %v1540
  %v1549 = vmul.f32 %v1487, %v1540
  %v1550 = vmul.f32 %v1489, %v1540
  %v1551 = vmul.f32 %v1491, %v1540
  %v1552 = vmul.f32 %v1493, %v1540
  %v1553 = vmul.f32 %v1495, %v1540
  %v1554 = vmul.f32 %v1497, %v1540
  %v1555 = vmul.f32 %v1499, %v1540
  %v1556 = vmul.f32 %v1501, %v1540
  %v1557 = vmul.f32 %v1503, %v1540
  %v1558 = vmul.f32 %v1505, %v1540
  %v1559 = vmul.f32 %v1507, %v1540
  %v1560 = vmul.f32 %v1509, %v1540
  %v1561 = vmul.f32 %v1511, %v1540
  %v1562 = vmul.f32 %v1513, %v1540
  %v1563 = vmul.f32 %v1515, %v1540
  %v1564 = vmul.f32 %v1517, %v1540
  %v1565 = vmul.f32 %v1519, %v1540
  %v1566 = vmul.f32 %v1521, %v1540
  %v1567 = vmul.f32 %v1523, %v1540
  %v1568 = vmul.f32 %v1525, %v1540
  %v1569 = vmul.f32 %v1527, %v1540
  %v1570 = vmul.f32 %v1529, %v1540
  %v1571 = vmul.f32 %v1531, %v1540
  %v1572 = vmul.f32 %v1533, %v1540
  %v1573 = vsub.f32 %v1375, %v1541
  %v1574 = vsub.f32 %v1378, %v1542
  %v1575 = vsub.f32 %v1381, %v1543
  %v1576 = vsub.f32 %v1384, %v1544
  %v1577 = vsub.f32 %v1387, %v1545
  %v1578 = vsub.f32 %v1390, %v1546
  %v1579 = vsub.f32 %v1393, %v1547
  %v1580 = vsub.f32 %v1396, %v1548
  %v1581 = vsub.f32 %v1399, %v1549
  %v1582 = vsub.f32 %v1402, %v1550
  %v1583 = vsub.f32 %v1405, %v1551
  %v1584 = vsub.f32 %v1408, %v1552
  %v1585 = vsub.f32 %v1411, %v1553
  %v1586 = vsub.f32 %v1414, %v1554
  %v1587 = vsub.f32 %v1417, %v1555
  %v1588 = vsub.f32 %v1420, %v1556
  %v1589 = vsub.f32 %v1423, %v1557
  %v1590 = vsub.f32 %v1426, %v1558
  %v1591 = vsub.f32 %v1429, %v1559
  %v1592 = vsub.f32 %v1432, %v1560
  %v1593 = vsub.f32 %v1435, %v1561
  %v1594 = vsub.f32 %v1438, %v1562
  %v1595 = vsub.f32 %v1441, %v1563
  %v1596 = vsub.f32 %v1444, %v1564
  %v1597 = vsub.f32 %v1447, %v1565
  %v1598 = vsub.f32 %v1450, %v1566
  %v1599 = vsub.f32 %v1453, %v1567
  %v1600 = vsub.f32 %v1456, %v1568
  %v1601 = vsub.f32 %v1459, %v1569
  %v1602 = vsub.f32 %v1462, %v1570
  %v1603 = vsub.f32 %v1465, %v1571
  %v1604 = vsub.f32 %v1468, %v1572
  %v1605 = vmul.f32 %v1573, %v1573
  %v1606 = vmul.f32 %v1574, %v1574
  %v1607 = vmul.f32 %v1575, %v1575
  %v1608 = vmul.f32 %v1576, %v1576
  %v1609 = vmul.f32 %v1577, %v1577
  %v1610 = vmul.f32 %v1578, %v1578
  %v1611 = vmul.f32 %v1579, %v1579
  %v1612 = vmul.f32 %v1580, %v1580
  %v1613 = vmul.f32 %v1581, %v1581
  %v1614 = vmul.f32 %v1582, %v1582
  %v1615 = vmul.f32 %v1583, %v1583
  %v1616 = vmul.f32 %v1584, %v1584
  %v1617 = vmul.f32 %v1585, %v1585
  %v1618 = vmul.f32 %v1586, %v1586
  %v1619 = vmul.f32 %v1587, %v1587
  %v1620 = vmul.f32 %v1588, %v1588
  %v1621 = vmul.f32 %v1589, %v1589
  %v1622 = vmul.f32 %v1590, %v1590
  %v1623 = vmul.f32 %v1591, %v1591
  %v1624 = vmul.f32 %v1592, %v1592
  %v1625 = vmul.f32 %v1593, %v1593
  %v1626 = vmul.f32 %v1594, %v1594
  %v1627 = vmul.f32 %v1595, %v1595
  %v1628 = vmul.f32 %v1596, %v1596
  %v1629 = vmul.f32 %v1597, %v1597
  %v1630 = vmul.f32 %v1598, %v1598
  %v1631 = vmul.f32 %v1599, %v1599
  %v1632 = vmul.f32 %v1600, %v1600
  %v1633 = vmul.f32 %v1601, %v1601
  %v1634 = vmul.f32 %v1602, %v1602
  %v1635 = vmul.f32 %v1603, %v1603
  %v1636 = vmul.f32 %v1604, %v1604
  %1637 = vadd.xlane.f32.xlu0 %v1605
  %v1638 = vpop.xlane.xlu0 %1637
  %1639 = vadd.xlane.f32.xlu0 %v1606
  %v1640 = vpop.xlane.xlu0 %1639
  %1641 = vadd.xlane.f32.xlu0 %v1607
  %v1642 = vpop.xlane.xlu0 %1641
  %1643 = vadd.xlane.f32.xlu0 %v1608
  %v1644 = vpop.xlane.xlu0 %1643
  %1645 = vadd.xlane.f32.xlu0 %v1609
  %v1646 = vpop.xlane.xlu0 %1645
  %1647 = vadd.xlane.f32.xlu0 %v1610
  %v1648 = vpop.xlane.xlu0 %1647
  %1649 = vadd.xlane.f32.xlu0 %v1611
  %v1650 = vpop.xlane.xlu0 %1649
  %1651 = vadd.xlane.f32.xlu0 %v1612
  %v1652 = vpop.xlane.xlu0 %1651
  %1653 = vadd.xlane.f32.xlu0 %v1613
  %v1654 = vpop.xlane.xlu0 %1653
  %1655 = vadd.xlane.f32.xlu0 %v1614
  %v1656 = vpop.xlane.xlu0 %1655
  %1657 = vadd.xlane.f32.xlu0 %v1615
  %v1658 = vpop.xlane.xlu0 %1657
  %1659 = vadd.xlane.f32.xlu0 %v1616
  %v1660 = vpop.xlane.xlu0 %1659
  %1661 = vadd.xlane.f32.xlu0 %v1617
  %v1662 = vpop.xlane.xlu0 %1661
  %1663 = vadd.xlane.f32.xlu0 %v1618
  %v1664 = vpop.xlane.xlu0 %1663
  %1665 = vadd.xlane.f32.xlu0 %v1619
  %v1666 = vpop.xlane.xlu0 %1665
  %1667 = vadd.xlane.f32.xlu0 %v1620
  %v1668 = vpop.xlane.xlu0 %1667
  %1669 = vadd.xlane.f32.xlu0 %v1621
  %v1670 = vpop.xlane.xlu0 %1669
  %1671 = vadd.xlane.f32.xlu0 %v1622
  %v1672 = vpop.xlane.xlu0 %1671
  %1673 = vadd.xlane.f32.xlu0 %v1623
  %v1674 = vpop.xlane.xlu0 %1673
  %1675 = vadd.xlane.f32.xlu0 %v1624
  %v1676 = vpop.xlane.xlu0 %1675
  %1677 = vadd.xlane.f32.xlu0 %v1625
  %v1678 = vpop.xlane.xlu0 %1677
  %1679 = vadd.xlane.f32.xlu0 %v1626
  %v1680 = vpop.xlane.xlu0 %1679
  %1681 = vadd.xlane.f32.xlu0 %v1627
  %v1682 = vpop.xlane.xlu0 %1681
  %1683 = vadd.xlane.f32.xlu0 %v1628
  %v1684 = vpop.xlane.xlu0 %1683
  %1685 = vadd.xlane.f32.xlu0 %v1629
  %v1686 = vpop.xlane.xlu0 %1685
  %1687 = vadd.xlane.f32.xlu0 %v1630
  %v1688 = vpop.xlane.xlu0 %1687
  %1689 = vadd.xlane.f32.xlu0 %v1631
  %v1690 = vpop.xlane.xlu0 %1689
  %1691 = vadd.xlane.f32.xlu0 %v1632
  %v1692 = vpop.xlane.xlu0 %1691
  %1693 = vadd.xlane.f32.xlu0 %v1633
  %v1694 = vpop.xlane.xlu0 %1693
  %1695 = vadd.xlane.f32.xlu0 %v1634
  %v1696 = vpop.xlane.xlu0 %1695
  %1697 = vadd.xlane.f32.xlu0 %v1635
  %v1698 = vpop.xlane.xlu0 %1697
  %1699 = vadd.xlane.f32.xlu0 %v1636
  %v1700 = vpop.xlane.xlu0 %1699
  %v1701 = vmul.f32 %v1638, %v1540
  %v1702 = vmul.f32 %v1640, %v1540
  %v1703 = vmul.f32 %v1642, %v1540
  %v1704 = vmul.f32 %v1644, %v1540
  %v1705 = vmul.f32 %v1646, %v1540
  %v1706 = vmul.f32 %v1648, %v1540
  %v1707 = vmul.f32 %v1650, %v1540
  %v1708 = vmul.f32 %v1652, %v1540
  %v1709 = vmul.f32 %v1654, %v1540
  %v1710 = vmul.f32 %v1656, %v1540
  %v1711 = vmul.f32 %v1658, %v1540
  %v1712 = vmul.f32 %v1660, %v1540
  %v1713 = vmul.f32 %v1662, %v1540
  %v1714 = vmul.f32 %v1664, %v1540
  %v1715 = vmul.f32 %v1666, %v1540
  %v1716 = vmul.f32 %v1668, %v1540
  %v1717 = vmul.f32 %v1670, %v1540
  %v1718 = vmul.f32 %v1672, %v1540
  %v1719 = vmul.f32 %v1674, %v1540
  %v1720 = vmul.f32 %v1676, %v1540
  %v1721 = vmul.f32 %v1678, %v1540
  %v1722 = vmul.f32 %v1680, %v1540
  %v1723 = vmul.f32 %v1682, %v1540
  %v1724 = vmul.f32 %v1684, %v1540
  %v1725 = vmul.f32 %v1686, %v1540
  %v1726 = vmul.f32 %v1688, %v1540
  %v1727 = vmul.f32 %v1690, %v1540
  %v1728 = vmul.f32 %v1692, %v1540
  %v1729 = vmul.f32 %v1694, %v1540
  %v1730 = vmul.f32 %v1696, %v1540
  %v1731 = vmul.f32 %v1698, %v1540
  %v1732 = vmul.f32 %v1700, %v1540
  %v1733 = vadd.f32 %v1701, 1e-12
  %v1734 = vadd.f32 %v1702, 1e-12
  %v1735 = vadd.f32 %v1703, 1e-12
  %v1736 = vadd.f32 %v1704, 1e-12
  %v1737 = vadd.f32 %v1705, 1e-12
  %v1738 = vadd.f32 %v1706, 1e-12
  %v1739 = vadd.f32 %v1707, 1e-12
  %v1740 = vadd.f32 %v1708, 1e-12
  %v1741 = vadd.f32 %v1709, 1e-12
  %v1742 = vadd.f32 %v1710, 1e-12
  %v1743 = vadd.f32 %v1711, 1e-12
  %v1744 = vadd.f32 %v1712, 1e-12
  %v1745 = vadd.f32 %v1713, 1e-12
  %v1746 = vadd.f32 %v1714, 1e-12
  %v1747 = vadd.f32 %v1715, 1e-12
  %v1748 = vadd.f32 %v1716, 1e-12
  %v1749 = vadd.f32 %v1717, 1e-12
  %v1750 = vadd.f32 %v1718, 1e-12
  %v1751 = vadd.f32 %v1719, 1e-12
  %v1752 = vadd.f32 %v1720, 1e-12
  %v1753 = vadd.f32 %v1721, 1e-12
  %v1754 = vadd.f32 %v1722, 1e-12
  %v1755 = vadd.f32 %v1723, 1e-12
  %v1756 = vadd.f32 %v1724, 1e-12
  %v1757 = vadd.f32 %v1725, 1e-12
  %v1758 = vadd.f32 %v1726, 1e-12
  %v1759 = vadd.f32 %v1727, 1e-12
  %v1760 = vadd.f32 %v1728, 1e-12
  %v1761 = vadd.f32 %v1729, 1e-12
  %v1762 = vadd.f32 %v1730, 1e-12
  %v1763 = vadd.f32 %v1731, 1e-12
  %v1764 = vadd.f32 %v1732, 1e-12
  %v1765 = vrsqrt.pop %v1733
  %v1766 = vmul.f32 %v1765, %v1733
  %v1767 = vmul.f32 %v1766, %v1765
  %v1768 = vmul.f32 0.5, %v1767
  %v1769 = vsub.f32 1.5, %v1768
  %v1770 = vmul.f32 %v1765, %v1769
  %vm1771 = vweird.f32 %v1733
  %vm1772 = vweird.f32 %v1765
  %vm1773 = vmor %vm1771, %vm1772
  %v1774 = vsel %vm1773, %v1765, %v1770
  %v1775 = vrsqrt.pop %v1734
  %v1776 = vmul.f32 %v1775, %v1734
  %v1777 = vmul.f32 %v1776, %v1775
  %v1778 = vmul.f32 0.5, %v1777
  %v1779 = vsub.f32 1.5, %v1778
  %v1780 = vmul.f32 %v1775, %v1779
  %vm1781 = vweird.f32 %v1734
  %vm1782 = vweird.f32 %v1775
  %vm1783 = vmor %vm1781, %vm1782
  %v1784 = vsel %vm1783, %v1775, %v1780
  %v1785 = vrsqrt.pop %v1735
  %v1786 = vmul.f32 %v1785, %v1735
  %v1787 = vmul.f32 %v1786, %v1785
  %v1788 = vmul.f32 0.5, %v1787
  %v1789 = vsub.f32 1.5, %v1788
  %v1790 = vmul.f32 %v1785, %v1789
  %vm1791 = vweird.f32 %v1735
  %vm1792 = vweird.f32 %v1785
  %vm1793 = vmor %vm1791, %vm1792
  %v1794 = vsel %vm1793, %v1785, %v1790
  %v1795 = vrsqrt.pop %v1736
  %v1796 = vmul.f32 %v1795, %v1736
  %v1797 = vmul.f32 %v1796, %v1795
  %v1798 = vmul.f32 0.5, %v1797
  %v1799 = vsub.f32 1.5, %v1798
  %v1800 = vmul.f32 %v1795, %v1799
  %vm1801 = vweird.f32 %v1736
  %vm1802 = vweird.f32 %v1795
  %vm1803 = vmor %vm1801, %vm1802
  %v1804 = vsel %vm1803, %v1795, %v1800
  %v1805 = vrsqrt.pop %v1737
  %v1806 = vmul.f32 %v1805, %v1737
  %v1807 = vmul.f32 %v1806, %v1805
  %v1808 = vmul.f32 0.5, %v1807
  %v1809 = vsub.f32 1.5, %v1808
  %v1810 = vmul.f32 %v1805, %v1809
  %vm1811 = vweird.f32 %v1737
  %vm1812 = vweird.f32 %v1805
  %vm1813 = vmor %vm1811, %vm1812
  %v1814 = vsel %vm1813, %v1805, %v1810
  %v1815 = vrsqrt.pop %v1738
  %v1816 = vmul.f32 %v1815, %v1738
  %v1817 = vmul.f32 %v1816, %v1815
  %v1818 = vmul.f32 0.5, %v1817
  %v1819 = vsub.f32 1.5, %v1818
  %v1820 = vmul.f32 %v1815, %v1819
  %vm1821 = vweird.f32 %v1738
  %vm1822 = vweird.f32 %v1815
  %vm1823 = vmor %vm1821, %vm1822
  %v1824 = vsel %vm1823, %v1815, %v1820
  %v1825 = vrsqrt.pop %v1739
  %v1826 = vmul.f32 %v1825, %v1739
  %v1827 = vmul.f32 %v1826, %v1825
  %v1828 = vmul.f32 0.5, %v1827
  %v1829 = vsub.f32 1.5, %v1828
  %v1830 = vmul.f32 %v1825, %v1829
  %vm1831 = vweird.f32 %v1739
  %vm1832 = vweird.f32 %v1825
  %vm1833 = vmor %vm1831, %vm1832
  %v1834 = vsel %vm1833, %v1825, %v1830
  %v1835 = vrsqrt.pop %v1740
  %v1836 = vmul.f32 %v1835, %v1740
  %v1837 = vmul.f32 %v1836, %v1835
  %v1838 = vmul.f32 0.5, %v1837
  %v1839 = vsub.f32 1.5, %v1838
  %v1840 = vmul.f32 %v1835, %v1839
  %vm1841 = vweird.f32 %v1740
  %vm1842 = vweird.f32 %v1835
  %vm1843 = vmor %vm1841, %vm1842
  %v1844 = vsel %vm1843, %v1835, %v1840
  %v1845 = vrsqrt.pop %v1741
  %v1846 = vmul.f32 %v1845, %v1741
  %v1847 = vmul.f32 %v1846, %v1845
  %v1848 = vmul.f32 0.5, %v1847
  %v1849 = vsub.f32 1.5, %v1848
  %v1850 = vmul.f32 %v1845, %v1849
  %vm1851 = vweird.f32 %v1741
  %vm1852 = vweird.f32 %v1845
  %vm1853 = vmor %vm1851, %vm1852
  %v1854 = vsel %vm1853, %v1845, %v1850
  %v1855 = vrsqrt.pop %v1742
  %v1856 = vmul.f32 %v1855, %v1742
  %v1857 = vmul.f32 %v1856, %v1855
  %v1858 = vmul.f32 0.5, %v1857
  %v1859 = vsub.f32 1.5, %v1858
  %v1860 = vmul.f32 %v1855, %v1859
  %vm1861 = vweird.f32 %v1742
  %vm1862 = vweird.f32 %v1855
  %vm1863 = vmor %vm1861, %vm1862
  %v1864 = vsel %vm1863, %v1855, %v1860
  %v1865 = vrsqrt.pop %v1743
  %v1866 = vmul.f32 %v1865, %v1743
  %v1867 = vmul.f32 %v1866, %v1865
  %v1868 = vmul.f32 0.5, %v1867
  %v1869 = vsub.f32 1.5, %v1868
  %v1870 = vmul.f32 %v1865, %v1869
  %vm1871 = vweird.f32 %v1743
  %vm1872 = vweird.f32 %v1865
  %vm1873 = vmor %vm1871, %vm1872
  %v1874 = vsel %vm1873, %v1865, %v1870
  %v1875 = vrsqrt.pop %v1744
  %v1876 = vmul.f32 %v1875, %v1744
  %v1877 = vmul.f32 %v1876, %v1875
  %v1878 = vmul.f32 0.5, %v1877
  %v1879 = vsub.f32 1.5, %v1878
  %v1880 = vmul.f32 %v1875, %v1879
  %vm1881 = vweird.f32 %v1744
  %vm1882 = vweird.f32 %v1875
  %vm1883 = vmor %vm1881, %vm1882
  %v1884 = vsel %vm1883, %v1875, %v1880
  %v1885 = vrsqrt.pop %v1745
  %v1886 = vmul.f32 %v1885, %v1745
  %v1887 = vmul.f32 %v1886, %v1885
  %v1888 = vmul.f32 0.5, %v1887
  %v1889 = vsub.f32 1.5, %v1888
  %v1890 = vmul.f32 %v1885, %v1889
  %vm1891 = vweird.f32 %v1745
  %vm1892 = vweird.f32 %v1885
  %vm1893 = vmor %vm1891, %vm1892
  %v1894 = vsel %vm1893, %v1885, %v1890
  %v1895 = vrsqrt.pop %v1746
  %v1896 = vmul.f32 %v1895, %v1746
  %v1897 = vmul.f32 %v1896, %v1895
  %v1898 = vmul.f32 0.5, %v1897
  %v1899 = vsub.f32 1.5, %v1898
  %v1900 = vmul.f32 %v1895, %v1899
  %vm1901 = vweird.f32 %v1746
  %vm1902 = vweird.f32 %v1895
  %vm1903 = vmor %vm1901, %vm1902
  %v1904 = vsel %vm1903, %v1895, %v1900
  %v1905 = vrsqrt.pop %v1747
  %v1906 = vmul.f32 %v1905, %v1747
  %v1907 = vmul.f32 %v1906, %v1905
  %v1908 = vmul.f32 0.5, %v1907
  %v1909 = vsub.f32 1.5, %v1908
  %v1910 = vmul.f32 %v1905, %v1909
  %vm1911 = vweird.f32 %v1747
  %vm1912 = vweird.f32 %v1905
  %vm1913 = vmor %vm1911, %vm1912
  %v1914 = vsel %vm1913, %v1905, %v1910
  %v1915 = vrsqrt.pop %v1748
  %v1916 = vmul.f32 %v1915, %v1748
  %v1917 = vmul.f32 %v1916, %v1915
  %v1918 = vmul.f32 0.5, %v1917
  %v1919 = vsub.f32 1.5, %v1918
  %v1920 = vmul.f32 %v1915, %v1919
  %vm1921 = vweird.f32 %v1748
  %vm1922 = vweird.f32 %v1915
  %vm1923 = vmor %vm1921, %vm1922
  %v1924 = vsel %vm1923, %v1915, %v1920
  %v1925 = vrsqrt.pop %v1749
  %v1926 = vmul.f32 %v1925, %v1749
  %v1927 = vmul.f32 %v1926, %v1925
  %v1928 = vmul.f32 0.5, %v1927
  %v1929 = vsub.f32 1.5, %v1928
  %v1930 = vmul.f32 %v1925, %v1929
  %vm1931 = vweird.f32 %v1749
  %vm1932 = vweird.f32 %v1925
  %vm1933 = vmor %vm1931, %vm1932
  %v1934 = vsel %vm1933, %v1925, %v1930
  %v1935 = vrsqrt.pop %v1750
  %v1936 = vmul.f32 %v1935, %v1750
  %v1937 = vmul.f32 %v1936, %v1935
  %v1938 = vmul.f32 0.5, %v1937
  %v1939 = vsub.f32 1.5, %v1938
  %v1940 = vmul.f32 %v1935, %v1939
  %vm1941 = vweird.f32 %v1750
  %vm1942 = vweird.f32 %v1935
  %vm1943 = vmor %vm1941, %vm1942
  %v1944 = vsel %vm1943, %v1935, %v1940
  %v1945 = vrsqrt.pop %v1751
  %v1946 = vmul.f32 %v1945, %v1751
  %v1947 = vmul.f32 %v1946, %v1945
  %v1948 = vmul.f32 0.5, %v1947
  %v1949 = vsub.f32 1.5, %v1948
  %v1950 = vmul.f32 %v1945, %v1949
  %vm1951 = vweird.f32 %v1751
  %vm1952 = vweird.f32 %v1945
  %vm1953 = vmor %vm1951, %vm1952
  %v1954 = vsel %vm1953, %v1945, %v1950
  %v1955 = vrsqrt.pop %v1752
  %v1956 = vmul.f32 %v1955, %v1752
  %v1957 = vmul.f32 %v1956, %v1955
  %v1958 = vmul.f32 0.5, %v1957
  %v1959 = vsub.f32 1.5, %v1958
  %v1960 = vmul.f32 %v1955, %v1959
  %vm1961 = vweird.f32 %v1752
  %vm1962 = vweird.f32 %v1955
  %vm1963 = vmor %vm1961, %vm1962
  %v1964 = vsel %vm1963, %v1955, %v1960
  %v1965 = vrsqrt.pop %v1753
  %v1966 = vmul.f32 %v1965, %v1753
  %v1967 = vmul.f32 %v1966, %v1965
  %v1968 = vmul.f32 0.5, %v1967
  %v1969 = vsub.f32 1.5, %v1968
  %v1970 = vmul.f32 %v1965, %v1969
  %vm1971 = vweird.f32 %v1753
  %vm1972 = vweird.f32 %v1965
  %vm1973 = vmor %vm1971, %vm1972
  %v1974 = vsel %vm1973, %v1965, %v1970
  %v1975 = vrsqrt.pop %v1754
  %v1976 = vmul.f32 %v1975, %v1754
  %v1977 = vmul.f32 %v1976, %v1975
  %v1978 = vmul.f32 0.5, %v1977
  %v1979 = vsub.f32 1.5, %v1978
  %v1980 = vmul.f32 %v1975, %v1979
  %vm1981 = vweird.f32 %v1754
  %vm1982 = vweird.f32 %v1975
  %vm1983 = vmor %vm1981, %vm1982
  %v1984 = vsel %vm1983, %v1975, %v1980
  %v1985 = vrsqrt.pop %v1755
  %v1986 = vmul.f32 %v1985, %v1755
  %v1987 = vmul.f32 %v1986, %v1985
  %v1988 = vmul.f32 0.5, %v1987
  %v1989 = vsub.f32 1.5, %v1988
  %v1990 = vmul.f32 %v1985, %v1989
  %vm1991 = vweird.f32 %v1755
  %vm1992 = vweird.f32 %v1985
  %vm1993 = vmor %vm1991, %vm1992
  %v1994 = vsel %vm1993, %v1985, %v1990
  %v1995 = vrsqrt.pop %v1756
  %v1996 = vmul.f32 %v1995, %v1756
  %v1997 = vmul.f32 %v1996, %v1995
  %v1998 = vmul.f32 0.5, %v1997
  %v1999 = vsub.f32 1.5, %v1998
  %v2000 = vmul.f32 %v1995, %v1999
  %vm2001 = vweird.f32 %v1756
  %vm2002 = vweird.f32 %v1995
  %vm2003 = vmor %vm2001, %vm2002
  %v2004 = vsel %vm2003, %v1995, %v2000
  %v2005 = vrsqrt.pop %v1757
  %v2006 = vmul.f32 %v2005, %v1757
  %v2007 = vmul.f32 %v2006, %v2005
  %v2008 = vmul.f32 0.5, %v2007
  %v2009 = vsub.f32 1.5, %v2008
  %v2010 = vmul.f32 %v2005, %v2009
  %vm2011 = vweird.f32 %v1757
  %vm2012 = vweird.f32 %v2005
  %vm2013 = vmor %vm2011, %vm2012
  %v2014 = vsel %vm2013, %v2005, %v2010
  %v2015 = vrsqrt.pop %v1758
  %v2016 = vmul.f32 %v2015, %v1758
  %v2017 = vmul.f32 %v2016, %v2015
  %v2018 = vmul.f32 0.5, %v2017
  %v2019 = vsub.f32 1.5, %v2018
  %v2020 = vmul.f32 %v2015, %v2019
  %vm2021 = vweird.f32 %v1758
  %vm2022 = vweird.f32 %v2015
  %vm2023 = vmor %vm2021, %vm2022
  %v2024 = vsel %vm2023, %v2015, %v2020
  %v2025 = vrsqrt.pop %v1759
  %v2026 = vmul.f32 %v2025, %v1759
  %v2027 = vmul.f32 %v2026, %v2025
  %v2028 = vmul.f32 0.5, %v2027
  %v2029 = vsub.f32 1.5, %v2028
  %v2030 = vmul.f32 %v2025, %v2029
  %vm2031 = vweird.f32 %v1759
  %vm2032 = vweird.f32 %v2025
  %vm2033 = vmor %vm2031, %vm2032
  %v2034 = vsel %vm2033, %v2025, %v2030
  %v2035 = vrsqrt.pop %v1760
  %v2036 = vmul.f32 %v2035, %v1760
  %v2037 = vmul.f32 %v2036, %v2035
  %v2038 = vmul.f32 0.5, %v2037
  %v2039 = vsub.f32 1.5, %v2038
  %v2040 = vmul.f32 %v2035, %v2039
  %vm2041 = vweird.f32 %v1760
  %vm2042 = vweird.f32 %v2035
  %vm2043 = vmor %vm2041, %vm2042
  %v2044 = vsel %vm2043, %v2035, %v2040
  %v2045 = vrsqrt.pop %v1761
  %v2046 = vmul.f32 %v2045, %v1761
  %v2047 = vmul.f32 %v2046, %v2045
  %v2048 = vmul.f32 0.5, %v2047
  %v2049 = vsub.f32 1.5, %v2048
  %v2050 = vmul.f32 %v2045, %v2049
  %vm2051 = vweird.f32 %v1761
  %vm2052 = vweird.f32 %v2045
  %vm2053 = vmor %vm2051, %vm2052
  %v2054 = vsel %vm2053, %v2045, %v2050
  %v2055 = vrsqrt.pop %v1762
  %v2056 = vmul.f32 %v2055, %v1762
  %v2057 = vmul.f32 %v2056, %v2055
  %v2058 = vmul.f32 0.5, %v2057
  %v2059 = vsub.f32 1.5, %v2058
  %v2060 = vmul.f32 %v2055, %v2059
  %vm2061 = vweird.f32 %v1762
  %vm2062 = vweird.f32 %v2055
  %vm2063 = vmor %vm2061, %vm2062
  %v2064 = vsel %vm2063, %v2055, %v2060
  %v2065 = vrsqrt.pop %v1763
  %v2066 = vmul.f32 %v2065, %v1763
  %v2067 = vmul.f32 %v2066, %v2065
  %v2068 = vmul.f32 0.5, %v2067
  %v2069 = vsub.f32 1.5, %v2068
  %v2070 = vmul.f32 %v2065, %v2069
  %vm2071 = vweird.f32 %v1763
  %vm2072 = vweird.f32 %v2065
  %vm2073 = vmor %vm2071, %vm2072
  %v2074 = vsel %vm2073, %v2065, %v2070
  %v2075 = vrsqrt.pop %v1764
  %v2076 = vmul.f32 %v2075, %v1764
  %v2077 = vmul.f32 %v2076, %v2075
  %v2078 = vmul.f32 0.5, %v2077
  %v2079 = vsub.f32 1.5, %v2078
  %v2080 = vmul.f32 %v2075, %v2079
  %vm2081 = vweird.f32 %v1764
  %vm2082 = vweird.f32 %v2075
  %vm2083 = vmor %vm2081, %vm2082
  %v2084 = vsel %vm2083, %v2075, %v2080
  %v2085 = vmul.f32 %v1573, %v1774
  %v2086 = vmul.f32 %v1574, %v1784
  %v2087 = vmul.f32 %v1575, %v1794
  %v2088 = vmul.f32 %v1576, %v1804
  %v2089 = vmul.f32 %v1577, %v1814
  %v2090 = vmul.f32 %v1578, %v1824
  %v2091 = vmul.f32 %v1579, %v1834
  %v2092 = vmul.f32 %v1580, %v1844
  %v2093 = vmul.f32 %v1581, %v1854
  %v2094 = vmul.f32 %v1582, %v1864
  %v2095 = vmul.f32 %v1583, %v1874
  %v2096 = vmul.f32 %v1584, %v1884
  %v2097 = vmul.f32 %v1585, %v1894
  %v2098 = vmul.f32 %v1586, %v1904
  %v2099 = vmul.f32 %v1587, %v1914
  %v2100 = vmul.f32 %v1588, %v1924
  %v2101 = vmul.f32 %v1589, %v1934
  %v2102 = vmul.f32 %v1590, %v1944
  %v2103 = vmul.f32 %v1591, %v1954
  %v2104 = vmul.f32 %v1592, %v1964
  %v2105 = vmul.f32 %v1593, %v1974
  %v2106 = vmul.f32 %v1594, %v1984
  %v2107 = vmul.f32 %v1595, %v1994
  %v2108 = vmul.f32 %v1596, %v2004
  %v2109 = vmul.f32 %v1597, %v2014
  %v2110 = vmul.f32 %v1598, %v2024
  %v2111 = vmul.f32 %v1599, %v2034
  %v2112 = vmul.f32 %v1600, %v2044
  %v2113 = vmul.f32 %v1601, %v2054
  %v2114 = vmul.f32 %v1602, %v2064
  %v2115 = vmul.f32 %v1603, %v2074
  %v2116 = vmul.f32 %v1604, %v2084
  %v2117 = vld [vmem:[%s4] sm:$0x1]
  %v2119 = vperm.slane %v2117, 0
  %v2121 = vmul.f32 %v2085, %v2119
  %v2122 = vmul.f32 %v2086, %v2119
  %v2123 = vmul.f32 %v2087, %v2119
  %v2124 = vmul.f32 %v2088, %v2119
  %v2125 = vmul.f32 %v2089, %v2119
  %v2126 = vmul.f32 %v2090, %v2119
  %v2127 = vmul.f32 %v2091, %v2119
  %v2128 = vmul.f32 %v2092, %v2119
  %v2129 = vmul.f32 %v2093, %v2119
  %v2130 = vmul.f32 %v2094, %v2119
  %v2131 = vmul.f32 %v2095, %v2119
  %v2132 = vmul.f32 %v2096, %v2119
  %v2133 = vmul.f32 %v2097, %v2119
  %v2134 = vmul.f32 %v2098, %v2119
  %v2135 = vmul.f32 %v2099, %v2119
  %v2136 = vmul.f32 %v2100, %v2119
  %v2137 = vmul.f32 %v2101, %v2119
  %v2138 = vmul.f32 %v2102, %v2119
  %v2139 = vmul.f32 %v2103, %v2119
  %v2140 = vmul.f32 %v2104, %v2119
  %v2141 = vmul.f32 %v2105, %v2119
  %v2142 = vmul.f32 %v2106, %v2119
  %v2143 = vmul.f32 %v2107, %v2119
  %v2144 = vmul.f32 %v2108, %v2119
  %v2145 = vmul.f32 %v2109, %v2119
  %v2146 = vmul.f32 %v2110, %v2119
  %v2147 = vmul.f32 %v2111, %v2119
  %v2148 = vmul.f32 %v2112, %v2119
  %v2149 = vmul.f32 %v2113, %v2119
  %v2150 = vmul.f32 %v2114, %v2119
  %v2151 = vmul.f32 %v2115, %v2119
  %v2152 = vmul.f32 %v2116, %v2119
  %v2153 = vld [vmem:[%s5] sm:$0x1]
  %v2155 = vperm.slane %v2153, 0
  %v2157 = vadd.f32 %v2121, %v2155
  %v2158 = vadd.f32 %v2122, %v2155
  %v2159 = vadd.f32 %v2123, %v2155
  %v2160 = vadd.f32 %v2124, %v2155
  %v2161 = vadd.f32 %v2125, %v2155
  %v2162 = vadd.f32 %v2126, %v2155
  %v2163 = vadd.f32 %v2127, %v2155
  %v2164 = vadd.f32 %v2128, %v2155
  %v2165 = vadd.f32 %v2129, %v2155
  %v2166 = vadd.f32 %v2130, %v2155
  %v2167 = vadd.f32 %v2131, %v2155
  %v2168 = vadd.f32 %v2132, %v2155
  %v2169 = vadd.f32 %v2133, %v2155
  %v2170 = vadd.f32 %v2134, %v2155
  %v2171 = vadd.f32 %v2135, %v2155
  %v2172 = vadd.f32 %v2136, %v2155
  %v2173 = vadd.f32 %v2137, %v2155
  %v2174 = vadd.f32 %v2138, %v2155
  %v2175 = vadd.f32 %v2139, %v2155
  %v2176 = vadd.f32 %v2140, %v2155
  %v2177 = vadd.f32 %v2141, %v2155
  %v2178 = vadd.f32 %v2142, %v2155
  %v2179 = vadd.f32 %v2143, %v2155
  %v2180 = vadd.f32 %v2144, %v2155
  %v2181 = vadd.f32 %v2145, %v2155
  %v2182 = vadd.f32 %v2146, %v2155
  %v2183 = vadd.f32 %v2147, %v2155
  %v2184 = vadd.f32 %v2148, %v2155
  %v2185 = vadd.f32 %v2149, %v2155
  %v2186 = vadd.f32 %v2150, %v2155
  %v2187 = vadd.f32 %v2151, %v2155
  %v2188 = vadd.f32 %v2152, %v2155
  %2189 = vst [vmem:[%s6] sm:$0xff] %v2157
  %2190 = vst [vmem:[%s6 + $0x8] sm:$0xff] %v2158
  %2191 = vst [vmem:[%s6 + $0x10] sm:$0xff] %v2159
  %2192 = vst [vmem:[%s6 + $0x18] sm:$0xff] %v2160
  %2193 = vst [vmem:[%s6 + $0x20] sm:$0xff] %v2161
  %2194 = vst [vmem:[%s6 + $0x28] sm:$0xff] %v2162
  %2195 = vst [vmem:[%s6 + $0x30] sm:$0xff] %v2163
  %2196 = vst [vmem:[%s6 + $0x38] sm:$0xff] %v2164
  %2197 = vst [vmem:[%s6 + $0x40] sm:$0xff] %v2165
  %2198 = vst [vmem:[%s6 + $0x48] sm:$0xff] %v2166
  %2199 = vst [vmem:[%s6 + $0x50] sm:$0xff] %v2167
  %2200 = vst [vmem:[%s6 + $0x58] sm:$0xff] %v2168
  %2201 = vst [vmem:[%s6 + $0x60] sm:$0xff] %v2169
  %2202 = vst [vmem:[%s6 + $0x68] sm:$0xff] %v2170
  %2203 = vst [vmem:[%s6 + $0x70] sm:$0xff] %v2171
  %2204 = vst [vmem:[%s6 + $0x78] sm:$0xff] %v2172
  %2205 = vst [vmem:[%s6 + $0x80] sm:$0xff] %v2173
  %2206 = vst [vmem:[%s6 + $0x88] sm:$0xff] %v2174
  %2207 = vst [vmem:[%s6 + $0x90] sm:$0xff] %v2175
  %2208 = vst [vmem:[%s6 + $0x98] sm:$0xff] %v2176
  %2209 = vst [vmem:[%s6 + $0xa0] sm:$0xff] %v2177
  %2210 = vst [vmem:[%s6 + $0xa8] sm:$0xff] %v2178
  %2211 = vst [vmem:[%s6 + $0xb0] sm:$0xff] %v2179
  %2212 = vst [vmem:[%s6 + $0xb8] sm:$0xff] %v2180
  %2213 = vst [vmem:[%s6 + $0xc0] sm:$0xff] %v2181
  %2214 = vst [vmem:[%s6 + $0xc8] sm:$0xff] %v2182
  %2215 = vst [vmem:[%s6 + $0xd0] sm:$0xff] %v2183
  %2216 = vst [vmem:[%s6 + $0xd8] sm:$0xff] %v2184
  %2217 = vst [vmem:[%s6 + $0xe0] sm:$0xff] %v2185
  %2218 = vst [vmem:[%s6 + $0xe8] sm:$0xff] %v2186
  %2219 = vst [vmem:[%s6 + $0xf0] sm:$0xff] %v2187
  %2220 = vst [vmem:[%s6 + $0xf8] sm:$0xff] %v2188
  // Predicated region
  $region26: #{bert_embeddings.1} parent=0 // pred_check
    _
  $region27: #{bert_embeddings.1} parent=0 // pred_check_branch
    %2222 = sbr.rel (0) target = $region29
  $region28: #{bert_embeddings.1} parent=0 // pred_region
    _
  $region29: #{bert_embeddings.1} parent=0 // pred_fallthru
    _
  // Predicated region
  $region30: #{bert_embeddings.1} parent=0 // pred_check
    _
  $region31: #{bert_embeddings.1} parent=0 // pred_check_branch
    %2224 = sbr.rel (0) target = $region33
  $region32: #{bert_embeddings.1} parent=0 // pred_region
    _
  $region33: #{bert_embeddings.1} parent=0 // pred_fallthru
    _

</llo_original>
